<compile_context>
chip_gen: v5e
topology: v5e:2x2
jax: 0.10.0
libtpu: 0.0.40
codegen_flags: <defaults>
</compile_context>

<pallas_src>
import jax
import jax.numpy as jnp
from jax.experimental import pallas as pl
from jax.experimental.pallas import tpu as pltpu


HIDDEN = 256
LANE = 128


def _round_up(x, m):
    return ((x + m - 1) // m) * m


def policy_mlp_kernel(x_ref,
                      w1_ref, b1_ref,
                      w2_ref, b2_ref,
                      w3_ref, b3_ref,
                      w4_ref, b4_ref,
                      out_ref):
    """Fused 4-layer MLP forward for one batch tile.

    Matmuls accumulate in f32 on the MXU; ReLU on the VPU; activations are cast
    back to the (possibly bf16) weight dtype between layers so every GEMM runs
    at full MXU rate.
    """
    x = x_ref[...]

    h = jnp.dot(x, w1_ref[...], preferred_element_type=jnp.float32) + b1_ref[...]
    h = jnp.maximum(h, 0.0).astype(w2_ref.dtype)

    h = jnp.dot(h, w2_ref[...], preferred_element_type=jnp.float32) + b2_ref[...]
    h = jnp.maximum(h, 0.0).astype(w3_ref.dtype)

    h = jnp.dot(h, w3_ref[...], preferred_element_type=jnp.float32) + b3_ref[...]
    h = jnp.maximum(h, 0.0).astype(w4_ref.dtype)

    out = jnp.dot(h, w4_ref[...], preferred_element_type=jnp.float32) + b4_ref[...]
    out_ref[...] = out.astype(out_ref.dtype)


def policy_forward(x, params, *, batch_tile=512, compute_dtype=jnp.bfloat16):
    """Policy MLP forward via a single fused, batch-tiled Pallas kernel.

    x: [B, input_dim] float32
    params: dict with w1..w4 ([in, out] layout, f32) and b1..b4 ([1, out], f32).
    compute_dtype: dtype for the matmul operands (bf16 default; accumulation is
                   always f32).  Use jnp.float32 for exact nn.Linear semantics.
    """
    B, in_dim = x.shape
    hidden = params["w1"].shape[1]
    num_actions = params["w4"].shape[1]

    # --- padding for lane-dense I/O ---------------------------------------
    K = _round_up(max(in_dim, 1), LANE)        # fc1 contraction dim -> 128-mult
    N = _round_up(max(num_actions, 1), LANE)   # output lanes -> 128-mult

    # --- batch tiling -------------------------------------------------------
    bt = _round_up(min(batch_tile, B), 8)      # (8,128) sublane constraint
    B_pad = _round_up(B, bt)
    grid = (B_pad // bt,)

    # --- pad + cast operands (in production, hoist this out of the hot path)
    cd = compute_dtype
    x_p = jnp.zeros((B_pad, K), cd).at[:B, :in_dim].set(x.astype(cd))
    w1 = jnp.zeros((K, hidden), cd).at[:in_dim, :].set(params["w1"].astype(cd))
    w2 = params["w2"].astype(cd)
    w3 = params["w3"].astype(cd)
    w4 = jnp.zeros((hidden, N), cd).at[:, :num_actions].set(params["w4"].astype(cd))
    b1 = params["b1"].astype(jnp.float32)
    b2 = params["b2"].astype(jnp.float32)
    b3 = params["b3"].astype(jnp.float32)
    b4 = jnp.zeros((1, N), jnp.float32).at[:, :num_actions].set(
        params["b4"].astype(jnp.float32))

    consts = (w1, b1, w2, b2, w3, b3, w4, b4)

    def _run(use_single_buffer_weights):
        def const_spec(shape):
            # Weights/biases never change across grid steps (constant index_map);
            # single-buffering them frees VMEM for larger batch tiles.
            if use_single_buffer_weights:
                return pl.BlockSpec(shape, lambda i: (0, 0),
                                    pipeline_mode=pl.Buffered(1))
            return pl.BlockSpec(shape, lambda i: (0, 0))

        in_specs = [pl.BlockSpec((bt, K), lambda i: (i, 0))]  # x: tiled on batch
        in_specs += [const_spec(a.shape) for a in consts]
        out_spec = pl.BlockSpec((bt, N), lambda i: (i, 0))     # lane-dense stores

        return pl.pallas_call(
            policy_mlp_kernel,
            out_shape=jax.ShapeDtypeStruct((B_pad, N), jnp.float32),
            grid_spec=pltpu.PrefetchScalarGridSpec(
                num_scalar_prefetch=0,
                grid=grid,
                in_specs=in_specs,
                out_specs=out_spec,
            ),
            compiler_params=pltpu.CompilerParams(
                dimension_semantics=("parallel",),
                vmem_limit_bytes=32 * 1024 * 1024,   # headroom on v7x's 64 MiB
            ),
        )(x_p, *consts)

    try:
        out_full = _run(True)
    except Exception:
        # Fallback if this Pallas build rejects pipeline_mode=pl.Buffered(1).
        out_full = _run(False)

    # Slice away batch padding and the zero-padded action lanes.
    return out_full[:B, :num_actions]


def init_policy_params(key, input_dim, output_dim, hidden=HIDDEN):
    """Deterministic init matching nn.Linear's default U(-1/sqrt(fan_in), +)."""
    dims = [(input_dim, hidden), (hidden, hidden),
            (hidden, hidden), (hidden, output_dim)]
    params = {}
    for idx, (fan_in, fan_out) in enumerate(dims, start=1):
        key, kw, kb = jax.random.split(key, 3)
        bound = 1.0 / jnp.sqrt(jnp.float32(fan_in))
        # stored as [in, out] so the kernel computes x @ W directly
        params[f"w{idx}"] = jax.random.uniform(
            kw, (fan_in, fan_out), jnp.float32, -bound, bound)
        params[f"b{idx}"] = jax.random.uniform(
            kb, (1, fan_out), jnp.float32, -bound, bound)
    return params


def policy_forward_ref(x, params):
    """Pure-JAX f32 reference (exact PyTorch semantics)."""
    h = jax.nn.relu(x @ params["w1"] + params["b1"])
    h = jax.nn.relu(h @ params["w2"] + params["b2"])
    h = jax.nn.relu(h @ params["w3"] + params["b3"])
    return h @ params["w4"] + params["b4"]


def policy_forward_ref_lowp(x, params, compute_dtype):
    """Pure-JAX reference emulating the low-precision (bf16 operand) kernel."""
    cd = compute_dtype
    h = x.astype(cd)
    for i in (1, 2, 3):
        h = jnp.dot(h, params[f"w{i}"].astype(cd),
                    preferred_element_type=jnp.float32) + params[f"b{i}"]
        h = jnp.maximum(h, 0.0).astype(cd)
    return jnp.dot(h, params["w4"].astype(cd),
                   preferred_element_type=jnp.float32) + params["b4"]


if __name__ == "__main__":
    key = jax.random.PRNGKey(0)
    key, kx1, kx2 = jax.random.split(key, 3)

    # env_params: num_features=16, num_actions=4
    input_dim, output_dim = 16, 4
    params = init_policy_params(key, input_dim, output_dim)

    # --- Case 1: tiny batch (the env use case), exact f32 semantics ---------
    x_small = jax.random.normal(kx1, (8, input_dim), jnp.float32)
    out_f32 = jax.block_until_ready(
        policy_forward(x_small, params, compute_dtype=jnp.float32))
    ref_f32 = policy_forward_ref(x_small, params)
    assert out_f32.shape == (8, output_dim)
    assert jnp.allclose(out_f32, ref_f32, atol=1e-4, rtol=1e-4), \
        "f32 kernel mismatch vs reference"

    # --- Case 2: larger, non-tile-aligned batch, bf16 perf path -------------
    x_big = jax.random.normal(kx2, (600, input_dim), jnp.float32)
    out_bf16 = jax.block_until_ready(
        policy_forward(x_big, params, batch_tile=256))  # grid of 3 steps
    assert out_bf16.shape == (600, output_dim)
    ref_lowp = policy_forward_ref_lowp(x_big, params, jnp.bfloat16)
    ref_full = policy_forward_ref(x_big, params)
    assert jnp.allclose(out_bf16, ref_lowp, atol=1e-2, rtol=1e-2), \
        "bf16 kernel mismatch vs bf16-emulated reference"
    assert jnp.allclose(out_bf16, ref_full, atol=1e-1, rtol=1e-1), \
        "bf16 kernel far from f32 reference"

    print("KERNEL_OK")
</pallas_src>

<mosaic_0001>
module attributes {stable_mosaic.version = 11 : i64} {
  func.func @policy_mlp_kernel(%arg0: i32, %arg1: memref<8x128xf32, #tpu.memory_space<vmem>>, %arg2: memref<128x256xf32, #tpu.memory_space<vmem>>, %arg3: memref<1x256xf32, #tpu.memory_space<vmem>>, %arg4: memref<256x256xf32, #tpu.memory_space<vmem>>, %arg5: memref<1x256xf32, #tpu.memory_space<vmem>>, %arg6: memref<256x256xf32, #tpu.memory_space<vmem>>, %arg7: memref<1x256xf32, #tpu.memory_space<vmem>>, %arg8: memref<256x128xf32, #tpu.memory_space<vmem>>, %arg9: memref<1x128xf32, #tpu.memory_space<vmem>>, %arg10: memref<8x128xf32, #tpu.memory_space<vmem>>) attributes {dimension_semantics = [#tpu.dimension_semantics<parallel>], iteration_bounds = array<i64: 1>, scalar_prefetch = 0 : i64, scratch_operands = 0 : i64, tpu.core_type = #tpu.core_type<tc>, window_params = [{transform_indices = @transform_0, window_bounds = array<i64: 8, 128>}, {pipeline_mode = #tpu.pipeline_mode<synchronous>, transform_indices = @transform_1, window_bounds = array<i64: 128, 256>}, {pipeline_mode = #tpu.pipeline_mode<synchronous>, transform_indices = @transform_2, window_bounds = array<i64: 1, 256>}, {pipeline_mode = #tpu.pipeline_mode<synchronous>, transform_indices = @transform_3, window_bounds = array<i64: 256, 256>}, {pipeline_mode = #tpu.pipeline_mode<synchronous>, transform_indices = @transform_4, window_bounds = array<i64: 1, 256>}, {pipeline_mode = #tpu.pipeline_mode<synchronous>, transform_indices = @transform_5, window_bounds = array<i64: 256, 256>}, {pipeline_mode = #tpu.pipeline_mode<synchronous>, transform_indices = @transform_6, window_bounds = array<i64: 1, 256>}, {pipeline_mode = #tpu.pipeline_mode<synchronous>, transform_indices = @transform_7, window_bounds = array<i64: 256, 128>}, {pipeline_mode = #tpu.pipeline_mode<synchronous>, transform_indices = @transform_8, window_bounds = array<i64: 1, 128>}, {transform_indices = @transform_9, window_bounds = array<i64: 8, 128>}]} {
    %c0 = arith.constant 0 : index
    %c0_0 = arith.constant 0 : index
    %0 = vector.load %arg1[%c0, %c0_0] : memref<8x128xf32, #tpu.memory_space<vmem>>, vector<8x128xf32>
    %c0_1 = arith.constant 0 : index
    %c0_2 = arith.constant 0 : index
    %1 = vector.load %arg2[%c0_1, %c0_2] : memref<128x256xf32, #tpu.memory_space<vmem>>, vector<128x256xf32>
    %cst = arith.constant dense<0.000000e+00> : vector<8x256xf32>
    %2 = tpu.matmul %0, %1, %cst {dimension_numbers = #tpu.dot_dimension_numbers<[1], [0], [0], [1], [0, 0, 1, 1], [], []>} : vector<8x128xf32>, vector<128x256xf32>, vector<8x256xf32> -> vector<8x256xf32>
    %c0_3 = arith.constant 0 : index
    %c0_4 = arith.constant 0 : index
    %3 = vector.load %arg3[%c0_3, %c0_4] : memref<1x256xf32, #tpu.memory_space<vmem>>, vector<1x256xf32>
    %4 = vector.broadcast %3 : vector<1x256xf32> to vector<8x256xf32>
    %5 = arith.addf %2, %4 : vector<8x256xf32>
    %cst_5 = arith.constant 0.000000e+00 : f32
    %6 = vector.broadcast %cst_5 : f32 to vector<8x256xf32>
    %7 = arith.maximumf %5, %6 : vector<8x256xf32>
    %c0_6 = arith.constant 0 : index
    %c0_7 = arith.constant 0 : index
    %8 = vector.load %arg4[%c0_6, %c0_7] : memref<256x256xf32, #tpu.memory_space<vmem>>, vector<256x256xf32>
    %cst_8 = arith.constant dense<0.000000e+00> : vector<8x256xf32>
    %9 = tpu.matmul %7, %8, %cst_8 {dimension_numbers = #tpu.dot_dimension_numbers<[1], [0], [0], [1], [0, 0, 1, 1], [], []>} : vector<8x256xf32>, vector<256x256xf32>, vector<8x256xf32> -> vector<8x256xf32>
    %c0_9 = arith.constant 0 : index
    %c0_10 = arith.constant 0 : index
    %10 = vector.load %arg5[%c0_9, %c0_10] : memref<1x256xf32, #tpu.memory_space<vmem>>, vector<1x256xf32>
    %11 = vector.broadcast %10 : vector<1x256xf32> to vector<8x256xf32>
    %12 = arith.addf %9, %11 : vector<8x256xf32>
    %cst_11 = arith.constant 0.000000e+00 : f32
    %13 = vector.broadcast %cst_11 : f32 to vector<8x256xf32>
    %14 = arith.maximumf %12, %13 : vector<8x256xf32>
    %c0_12 = arith.constant 0 : index
    %c0_13 = arith.constant 0 : index
    %15 = vector.load %arg6[%c0_12, %c0_13] : memref<256x256xf32, #tpu.memory_space<vmem>>, vector<256x256xf32>
    %cst_14 = arith.constant dense<0.000000e+00> : vector<8x256xf32>
    %16 = tpu.matmul %14, %15, %cst_14 {dimension_numbers = #tpu.dot_dimension_numbers<[1], [0], [0], [1], [0, 0, 1, 1], [], []>} : vector<8x256xf32>, vector<256x256xf32>, vector<8x256xf32> -> vector<8x256xf32>
    %c0_15 = arith.constant 0 : index
    %c0_16 = arith.constant 0 : index
    %17 = vector.load %arg7[%c0_15, %c0_16] : memref<1x256xf32, #tpu.memory_space<vmem>>, vector<1x256xf32>
    %18 = vector.broadcast %17 : vector<1x256xf32> to vector<8x256xf32>
    %19 = arith.addf %16, %18 : vector<8x256xf32>
    %cst_17 = arith.constant 0.000000e+00 : f32
    %20 = vector.broadcast %cst_17 : f32 to vector<8x256xf32>
    %21 = arith.maximumf %19, %20 : vector<8x256xf32>
    %c0_18 = arith.constant 0 : index
    %c0_19 = arith.constant 0 : index
    %22 = vector.load %arg8[%c0_18, %c0_19] : memref<256x128xf32, #tpu.memory_space<vmem>>, vector<256x128xf32>
    %cst_20 = arith.constant dense<0.000000e+00> : vector<8x128xf32>
    %23 = tpu.matmul %21, %22, %cst_20 {dimension_numbers = #tpu.dot_dimension_numbers<[1], [0], [0], [1], [0, 0, 1, 1], [], []>} : vector<8x256xf32>, vector<256x128xf32>, vector<8x128xf32> -> vector<8x128xf32>
    %c0_21 = arith.constant 0 : index
    %c0_22 = arith.constant 0 : index
    %24 = vector.load %arg9[%c0_21, %c0_22] : memref<1x128xf32, #tpu.memory_space<vmem>>, vector<1x128xf32>
    %25 = vector.broadcast %24 : vector<1x128xf32> to vector<8x128xf32>
    %26 = arith.addf %23, %25 : vector<8x128xf32>
    %c0_23 = arith.constant 0 : index
    %c0_24 = arith.constant 0 : index
    %27 = vector.load %arg10[%c0_23, %c0_24] : memref<8x128xf32, #tpu.memory_space<vmem>>, vector<8x128xf32>
    tpu.vector_store %arg10[%c0_23, %c0_24], %26 {strides = array<i32>} : memref<8x128xf32, #tpu.memory_space<vmem>>, vector<8x128xf32>,
    return
  }
  func.func @transform_0(%arg0: i32) -> (i32, i32) {
    %c0_i32 = arith.constant 0 : i32
    %c0_i32_0 = arith.constant 0 : i32
    return %arg0, %c0_i32 : i32, i32
  }
  func.func @transform_1(%arg0: i32) -> (i32, i32) {
    %c0_i32 = arith.constant 0 : i32
    %c0_i32_0 = arith.constant 0 : i32
    %c0_i32_1 = arith.constant 0 : i32
    return %c0_i32, %c0_i32_0 : i32, i32
  }
  func.func @transform_2(%arg0: i32) -> (i32, i32) {
    %c0_i32 = arith.constant 0 : i32
    %c0_i32_0 = arith.constant 0 : i32
    %c0_i32_1 = arith.constant 0 : i32
    return %c0_i32, %c0_i32_0 : i32, i32
  }
  func.func @transform_3(%arg0: i32) -> (i32, i32) {
    %c0_i32 = arith.constant 0 : i32
    %c0_i32_0 = arith.constant 0 : i32
    %c0_i32_1 = arith.constant 0 : i32
    return %c0_i32, %c0_i32_0 : i32, i32
  }
  func.func @transform_4(%arg0: i32) -> (i32, i32) {
    %c0_i32 = arith.constant 0 : i32
    %c0_i32_0 = arith.constant 0 : i32
    %c0_i32_1 = arith.constant 0 : i32
    return %c0_i32, %c0_i32_0 : i32, i32
  }
  func.func @transform_5(%arg0: i32) -> (i32, i32) {
    %c0_i32 = arith.constant 0 : i32
    %c0_i32_0 = arith.constant 0 : i32
    %c0_i32_1 = arith.constant 0 : i32
    return %c0_i32, %c0_i32_0 : i32, i32
  }
  func.func @transform_6(%arg0: i32) -> (i32, i32) {
    %c0_i32 = arith.constant 0 : i32
    %c0_i32_0 = arith.constant 0 : i32
    %c0_i32_1 = arith.constant 0 : i32
    return %c0_i32, %c0_i32_0 : i32, i32
  }
  func.func @transform_7(%arg0: i32) -> (i32, i32) {
    %c0_i32 = arith.constant 0 : i32
    %c0_i32_0 = arith.constant 0 : i32
    %c0_i32_1 = arith.constant 0 : i32
    return %c0_i32, %c0_i32_0 : i32, i32
  }
  func.func @transform_8(%arg0: i32) -> (i32, i32) {
    %c0_i32 = arith.constant 0 : i32
    %c0_i32_0 = arith.constant 0 : i32
    %c0_i32_1 = arith.constant 0 : i32
    return %c0_i32, %c0_i32_0 : i32, i32
  }
  func.func @transform_9(%arg0: i32) -> (i32, i32) {
    %c0_i32 = arith.constant 0 : i32
    %c0_i32_0 = arith.constant 0 : i32
    return %arg0, %c0_i32 : i32, i32
  }
}

module attributes {stable_mosaic.version = 11 : i64} {
  func.func @policy_mlp_kernel(%arg0: i32, %arg1: memref<8x128xf32, #tpu.memory_space<vmem>>, %arg2: memref<128x256xf32, #tpu.memory_space<vmem>>, %arg3: memref<1x256xf32, #tpu.memory_space<vmem>>, %arg4: memref<256x256xf32, #tpu.memory_space<vmem>>, %arg5: memref<1x256xf32, #tpu.memory_space<vmem>>, %arg6: memref<256x256xf32, #tpu.memory_space<vmem>>, %arg7: memref<1x256xf32, #tpu.memory_space<vmem>>, %arg8: memref<256x128xf32, #tpu.memory_space<vmem>>, %arg9: memref<1x128xf32, #tpu.memory_space<vmem>>, %arg10: memref<8x128xf32, #tpu.memory_space<vmem>>) attributes {dimension_semantics = [#tpu.dimension_semantics<parallel>], iteration_bounds = array<i64: 1>, scalar_prefetch = 0 : i64, scratch_operands = 0 : i64, tpu.core_type = #tpu.core_type<tc>, window_params = [{transform_indices = @transform_0, window_bounds = array<i64: 8, 128>}, {pipeline_mode = #tpu.pipeline_mode<synchronous>, transform_indices = @transform_1, window_bounds = array<i64: 128, 256>}, {pipeline_mode = #tpu.pipeline_mode<synchronous>, transform_indices = @transform_2, window_bounds = array<i64: 1, 256>}, {pipeline_mode = #tpu.pipeline_mode<synchronous>, transform_indices = @transform_3, window_bounds = array<i64: 256, 256>}, {pipeline_mode = #tpu.pipeline_mode<synchronous>, transform_indices = @transform_4, window_bounds = array<i64: 1, 256>}, {pipeline_mode = #tpu.pipeline_mode<synchronous>, transform_indices = @transform_5, window_bounds = array<i64: 256, 256>}, {pipeline_mode = #tpu.pipeline_mode<synchronous>, transform_indices = @transform_6, window_bounds = array<i64: 1, 256>}, {pipeline_mode = #tpu.pipeline_mode<synchronous>, transform_indices = @transform_7, window_bounds = array<i64: 256, 128>}, {pipeline_mode = #tpu.pipeline_mode<synchronous>, transform_indices = @transform_8, window_bounds = array<i64: 1, 128>}, {transform_indices = @transform_9, window_bounds = array<i64: 8, 128>}]} {
    %c0 = arith.constant 0 : index
    %c0_0 = arith.constant 0 : index
    %0 = vector.load %arg1[%c0, %c0_0] : memref<8x128xf32, #tpu.memory_space<vmem>>, vector<8x128xf32>
    %c0_1 = arith.constant 0 : index
    %c0_2 = arith.constant 0 : index
    %1 = vector.load %arg2[%c0_1, %c0_2] : memref<128x256xf32, #tpu.memory_space<vmem>>, vector<128x256xf32>
    %cst = arith.constant dense<0.000000e+00> : vector<8x256xf32>
    %2 = tpu.matmul %0, %1, %cst {dimension_numbers = #tpu.dot_dimension_numbers<[1], [0], [0], [1], [0, 0, 1, 1], [], []>} : vector<8x128xf32>, vector<128x256xf32>, vector<8x256xf32> -> vector<8x256xf32>
    %c0_3 = arith.constant 0 : index
    %c0_4 = arith.constant 0 : index
    %3 = vector.load %arg3[%c0_3, %c0_4] : memref<1x256xf32, #tpu.memory_space<vmem>>, vector<1x256xf32>
    %4 = vector.broadcast %3 : vector<1x256xf32> to vector<8x256xf32>
    %5 = arith.addf %2, %4 : vector<8x256xf32>
    %cst_5 = arith.constant 0.000000e+00 : f32
    %6 = vector.broadcast %cst_5 : f32 to vector<8x256xf32>
    %7 = arith.maximumf %5, %6 : vector<8x256xf32>
    %c0_6 = arith.constant 0 : index
    %c0_7 = arith.constant 0 : index
    %8 = vector.load %arg4[%c0_6, %c0_7] : memref<256x256xf32, #tpu.memory_space<vmem>>, vector<256x256xf32>
    %cst_8 = arith.constant dense<0.000000e+00> : vector<8x256xf32>
    %9 = tpu.matmul %7, %8, %cst_8 {dimension_numbers = #tpu.dot_dimension_numbers<[1], [0], [0], [1], [0, 0, 1, 1], [], []>} : vector<8x256xf32>, vector<256x256xf32>, vector<8x256xf32> -> vector<8x256xf32>
    %c0_9 = arith.constant 0 : index
    %c0_10 = arith.constant 0 : index
    %10 = vector.load %arg5[%c0_9, %c0_10] : memref<1x256xf32, #tpu.memory_space<vmem>>, vector<1x256xf32>
    %11 = vector.broadcast %10 : vector<1x256xf32> to vector<8x256xf32>
    %12 = arith.addf %9, %11 : vector<8x256xf32>
    %cst_11 = arith.constant 0.000000e+00 : f32
    %13 = vector.broadcast %cst_11 : f32 to vector<8x256xf32>
    %14 = arith.maximumf %12, %13 : vector<8x256xf32>
    %c0_12 = arith.constant 0 : index
    %c0_13 = arith.constant 0 : index
    %15 = vector.load %arg6[%c0_12, %c0_13] : memref<256x256xf32, #tpu.memory_space<vmem>>, vector<256x256xf32>
    %cst_14 = arith.constant dense<0.000000e+00> : vector<8x256xf32>
    %16 = tpu.matmul %14, %15, %cst_14 {dimension_numbers = #tpu.dot_dimension_numbers<[1], [0], [0], [1], [0, 0, 1, 1], [], []>} : vector<8x256xf32>, vector<256x256xf32>, vector<8x256xf32> -> vector<8x256xf32>
    %c0_15 = arith.constant 0 : index
    %c0_16 = arith.constant 0 : index
    %17 = vector.load %arg7[%c0_15, %c0_16] : memref<1x256xf32, #tpu.memory_space<vmem>>, vector<1x256xf32>
    %18 = vector.broadcast %17 : vector<1x256xf32> to vector<8x256xf32>
    %19 = arith.addf %16, %18 : vector<8x256xf32>
    %cst_17 = arith.constant 0.000000e+00 : f32
    %20 = vector.broadcast %cst_17 : f32 to vector<8x256xf32>
    %21 = arith.maximumf %19, %20 : vector<8x256xf32>
    %c0_18 = arith.constant 0 : index
    %c0_19 = arith.constant 0 : index
    %22 = vector.load %arg8[%c0_18, %c0_19] : memref<256x128xf32, #tpu.memory_space<vmem>>, vector<256x128xf32>
    %cst_20 = arith.constant dense<0.000000e+00> : vector<8x128xf32>
    %23 = tpu.matmul %21, %22, %cst_20 {dimension_numbers = #tpu.dot_dimension_numbers<[1], [0], [0], [1], [0, 0, 1, 1], [], []>} : vector<8x256xf32>, vector<256x128xf32>, vector<8x128xf32> -> vector<8x128xf32>
    %c0_21 = arith.constant 0 : index
    %c0_22 = arith.constant 0 : index
    %24 = vector.load %arg9[%c0_21, %c0_22] : memref<1x128xf32, #tpu.memory_space<vmem>>, vector<1x128xf32>
    %25 = vector.broadcast %24 : vector<1x128xf32> to vector<8x128xf32>
    %26 = arith.addf %23, %25 : vector<8x128xf32>
    %c0_23 = arith.constant 0 : index
    %c0_24 = arith.constant 0 : index
    %27 = vector.load %arg10[%c0_23, %c0_24] : memref<8x128xf32, #tpu.memory_space<vmem>>, vector<8x128xf32>
    tpu.vector_store %arg10[%c0_23, %c0_24], %26 {strides = array<i32>} : memref<8x128xf32, #tpu.memory_space<vmem>>, vector<8x128xf32>,
    return
  }
  func.func @transform_0(%arg0: i32) -> (i32, i32) {
    %c0_i32 = arith.constant 0 : i32
    %c0_i32_0 = arith.constant 0 : i32
    return %arg0, %c0_i32 : i32, i32
  }
  func.func @transform_1(%arg0: i32) -> (i32, i32) {
    %c0_i32 = arith.constant 0 : i32
    %c0_i32_0 = arith.constant 0 : i32
    %c0_i32_1 = arith.constant 0 : i32
    return %c0_i32, %c0_i32_0 : i32, i32
  }
  func.func @transform_2(%arg0: i32) -> (i32, i32) {
    %c0_i32 = arith.constant 0 : i32
    %c0_i32_0 = arith.constant 0 : i32
    %c0_i32_1 = arith.constant 0 : i32
    return %c0_i32, %c0_i32_0 : i32, i32
  }
  func.func @transform_3(%arg0: i32) -> (i32, i32) {
    %c0_i32 = arith.constant 0 : i32
    %c0_i32_0 = arith.constant 0 : i32
    %c0_i32_1 = arith.constant 0 : i32
    return %c0_i32, %c0_i32_0 : i32, i32
  }
  func.func @transform_4(%arg0: i32) -> (i32, i32) {
    %c0_i32 = arith.constant 0 : i32
    %c0_i32_0 = arith.constant 0 : i32
    %c0_i32_1 = arith.constant 0 : i32
    return %c0_i32, %c0_i32_0 : i32, i32
  }
  func.func @transform_5(%arg0: i32) -> (i32, i32) {
    %c0_i32 = arith.constant 0 : i32
    %c0_i32_0 = arith.constant 0 : i32
    %c0_i32_1 = arith.constant 0 : i32
    return %c0_i32, %c0_i32_0 : i32, i32
  }
  func.func @transform_6(%arg0: i32) -> (i32, i32) {
    %c0_i32 = arith.constant 0 : i32
    %c0_i32_0 = arith.constant 0 : i32
    %c0_i32_1 = arith.constant 0 : i32
    return %c0_i32, %c0_i32_0 : i32, i32
  }
  func.func @transform_7(%arg0: i32) -> (i32, i32) {
    %c0_i32 = arith.constant 0 : i32
    %c0_i32_0 = arith.constant 0 : i32
    %c0_i32_1 = arith.constant 0 : i32
    return %c0_i32, %c0_i32_0 : i32, i32
  }
  func.func @transform_8(%arg0: i32) -> (i32, i32) {
    %c0_i32 = arith.constant 0 : i32
    %c0_i32_0 = arith.constant 0 : i32
    %c0_i32_1 = arith.constant 0 : i32
    return %c0_i32, %c0_i32_0 : i32, i32
  }
  func.func @transform_9(%arg0: i32) -> (i32, i32) {
    %c0_i32 = arith.constant 0 : i32
    %c0_i32_0 = arith.constant 0 : i32
    return %arg0, %c0_i32 : i32, i32
  }
}

</mosaic_0001>

<llo_original>
// kernel: tpu_custom_call.1
$region0: #{tpu_custom_call.1}
  #allocation0 [shape = 'u32[]', space=smem, size = 0x4, offset = 0x4, fixed_abs, tag = 'smem constant byte address 0x4 - core index']
  #allocation1 [shape = 'u32[72,128]{1,0:T(1,128)}', space=vmem, size = 0x9000, scoped, tag = 'internal scratch']
  %s0 = inlined_call_operand.hbm [shape: f32[8,128], index: 0, kind: input, shape index: {}]
  %s1 = inlined_call_operand.hbm [shape: f32[128,256], index: 1, kind: input, shape index: {}]
  %s2 = inlined_call_operand.hbm [shape: f32[1,256], index: 2, kind: input, shape index: {}]
  %s3 = inlined_call_operand.hbm [shape: f32[256,256], index: 3, kind: input, shape index: {}]
  %s4 = inlined_call_operand.vmem [shape: f32[1,256], index: 4, kind: input, shape index: {}]
  %s5 = inlined_call_operand.hbm [shape: f32[256,256], index: 5, kind: input, shape index: {}]
  %s6 = inlined_call_operand.vmem [shape: f32[1,256], index: 6, kind: input, shape index: {}]
  %s7 = inlined_call_operand.hbm [shape: f32[256,128], index: 7, kind: input, shape index: {}]
  %s8 = inlined_call_operand.vmem [shape: f32[1,128], index: 8, kind: input, shape index: {}]
  %s9 = inlined_call_operand.hbm [shape: f32[8,128], index: 9, kind: output, shape index: {}]
  %s10 = sld [smem:[#allocation0]]
  $region70: #{tpu_custom_call.1} parent=0
    _
  %s12 = ssub.s32 1, %s10
  %s13 = scalar_select 0, %s12, %s10
  $region1: #{tpu_custom_call.1} parent=0
    #allocation2 [shape = 'u8[4096]{0}', space=vmem, size = 0x1000, scoped, tag = 'input window, operand 0, single buffered']
    #allocation3 [shape = 's32[1]{0}', space=sflag, size = 0x4, scoped, tag = 'scoped memory for tpu_custom_call.1']
    #allocation4 [shape = 's32[1]{0}', space=sflag, size = 0x4, scoped, tag = 'scoped memory for tpu_custom_call.1']
    #allocation5 [shape = 'u8[131072]{0}', space=vmem, size = 0x20000, scoped, tag = 'input window, operand 1, single buffered']
    #allocation6 [shape = 's32[1]{0}', space=sflag, size = 0x4, scoped, tag = 'scoped memory for tpu_custom_call.1']
    #allocation7 [shape = 'u8[1024]{0}', space=vmem, size = 0x400, scoped, tag = 'input window, operand 2, single buffered']
    #allocation8 [shape = 'u8[262144]{0}', space=vmem, size = 0x40000, scoped, tag = 'input window, operand 3, single buffered']
    #allocation9 [shape = 's32[1]{0}', space=sflag, size = 0x4, scoped, tag = 'scoped memory for tpu_custom_call.1']
    #allocation10 [shape = 'u8[262144]{0}', space=vmem, size = 0x40000, scoped, tag = 'input window, operand 5, single buffered']
    #allocation11 [shape = 'u8[131072]{0}', space=vmem, size = 0x20000, scoped, tag = 'input window, operand 7, single buffered']
    #allocation12 [shape = 's32[1]{0}', space=sflag, size = 0x4, scoped, tag = 'scoped memory for tpu_custom_call.1']
    #allocation13 [shape = 'u8[4096]{0}', space=vmem, size = 0x1000, scoped, tag = 'output window, operand 0, single buffered']
    %14 = vsyncpa [#allocation3], 0
    %15 = vsyncpa [#allocation6], 0
    %16 = vsyncpa [#allocation9], 0
    %17 = vsyncpa [#allocation12], 0
    %18 = vsyncpa [#allocation4], 0
    // Predicated region
    $region2: #{tpu_custom_call.1} parent=1 // pred_check
      _
    $region3: #{tpu_custom_call.1} parent=1 // pred_check_branch
      %20 = sbr.rel (0) target = $region5
    $region4: #{tpu_custom_call.1} parent=1 // pred_region
      %22 = vsyncadd [#allocation3], 0
      %s24 = sshll.u32 %s0, 4
      %s25 = int_to_ptr.hbm [resolvable:$true] %s24
      %s26 = sshll.u32 [#allocation2], 4
      %s27 = int_to_ptr.vmem [resolvable:$true] %s26
      %29 = dma.hbm_to_vmem [thread:$0]  %s25, 128, %s27, [#allocation3]
    $region5: #{tpu_custom_call.1} parent=1 // pred_fallthru
      _
    // Predicated region
    $region6: #{tpu_custom_call.1} parent=1 // pred_check
      _
    $region7: #{tpu_custom_call.1} parent=1 // pred_check_branch
      %31 = sbr.rel (0) target = $region9
    $region8: #{tpu_custom_call.1} parent=1 // pred_region
      %33 = vsyncadd [#allocation6], 0
      %s34 = sshll.u32 %s1, 4
      %s35 = int_to_ptr.hbm [resolvable:$true] %s34
      %s36 = sshll.u32 [#allocation5], 4
      %s37 = int_to_ptr.vmem [resolvable:$true] %s36
      %42 = dma.hbm_to_vmem [thread:$0]  %s35, 4096, %s37, [#allocation6], 256, 256, 16
    $region9: #{tpu_custom_call.1} parent=1 // pred_fallthru
      _
    // Predicated region
    $region10: #{tpu_custom_call.1} parent=1 // pred_check
      _
    $region11: #{tpu_custom_call.1} parent=1 // pred_check_branch
      %44 = sbr.rel (0) target = $region13
    $region12: #{tpu_custom_call.1} parent=1 // pred_region
      %46 = vsyncadd [#allocation6], 0
      %s48 = sshll.u32 %s2, 4
      %s49 = int_to_ptr.hbm [resolvable:$true] %s48
      %s50 = sshll.u32 [#allocation7], 4
      %s51 = int_to_ptr.vmem [resolvable:$true] %s50
      %53 = dma.hbm_to_vmem [thread:$0]  %s49, 32, %s51, [#allocation6]
    $region13: #{tpu_custom_call.1} parent=1 // pred_fallthru
      _
    // Predicated region
    $region14: #{tpu_custom_call.1} parent=1 // pred_check
      _
    $region15: #{tpu_custom_call.1} parent=1 // pred_check_branch
      %55 = sbr.rel (0) target = $region17
    $region16: #{tpu_custom_call.1} parent=1 // pred_region
      %57 = vsyncadd [#allocation9], 0
      %s58 = sshll.u32 %s3, 4
      %s59 = int_to_ptr.hbm [resolvable:$true] %s58
      %s60 = sshll.u32 [#allocation8], 4
      %s61 = int_to_ptr.vmem [resolvable:$true] %s60
      %66 = dma.hbm_to_vmem [thread:$0]  %s59, 8192, %s61, [#allocation9], 256, 256, 16
    $region17: #{tpu_custom_call.1} parent=1 // pred_fallthru
      _
    // Predicated region
    $region18: #{tpu_custom_call.1} parent=1 // pred_check
      _
    $region19: #{tpu_custom_call.1} parent=1 // pred_check_branch
      %68 = sbr.rel (0) target = $region21
    $region20: #{tpu_custom_call.1} parent=1 // pred_region
      _
    $region21: #{tpu_custom_call.1} parent=1 // pred_fallthru
      _
    // Predicated region
    $region22: #{tpu_custom_call.1} parent=1 // pred_check
      _
    $region23: #{tpu_custom_call.1} parent=1 // pred_check_branch
      %70 = sbr.rel (0) target = $region25
    $region24: #{tpu_custom_call.1} parent=1 // pred_region
      %72 = vsyncadd [#allocation9], 0
      %s73 = sshll.u32 %s5, 4
      %s74 = int_to_ptr.hbm [resolvable:$true] %s73
      %s75 = sshll.u32 [#allocation10], 4
      %s76 = int_to_ptr.vmem [resolvable:$true] %s75
      %81 = dma.hbm_to_vmem [thread:$0]  %s74, 8192, %s76, [#allocation9], 256, 256, 16
    $region25: #{tpu_custom_call.1} parent=1 // pred_fallthru
      _
    // Predicated region
    $region26: #{tpu_custom_call.1} parent=1 // pred_check
      _
    $region27: #{tpu_custom_call.1} parent=1 // pred_check_branch
      %83 = sbr.rel (0) target = $region29
    $region28: #{tpu_custom_call.1} parent=1 // pred_region
      _
    $region29: #{tpu_custom_call.1} parent=1 // pred_fallthru
      _
    // Predicated region
    $region30: #{tpu_custom_call.1} parent=1 // pred_check
      _
    $region31: #{tpu_custom_call.1} parent=1 // pred_check_branch
      %85 = sbr.rel (0) target = $region33
    $region32: #{tpu_custom_call.1} parent=1 // pred_region
      %87 = vsyncadd [#allocation12], 0
      %s88 = sshll.u32 %s7, 4
      %s89 = int_to_ptr.hbm [resolvable:$true] %s88
      %s90 = sshll.u32 [#allocation11], 4
      %s91 = int_to_ptr.vmem [resolvable:$true] %s90
      %96 = dma.hbm_to_vmem [thread:$0]  %s89, 4096, %s91, [#allocation12], 128, 128, 8
    $region33: #{tpu_custom_call.1} parent=1 // pred_fallthru
      _
    // Predicated region
    $region34: #{tpu_custom_call.1} parent=1 // pred_check
      _
    $region35: #{tpu_custom_call.1} parent=1 // pred_check_branch
      %98 = sbr.rel (0) target = $region37
    $region36: #{tpu_custom_call.1} parent=1 // pred_region
      _
    $region37: #{tpu_custom_call.1} parent=1 // pred_fallthru
      _
    // Predicated region
    $region38: #{tpu_custom_call.1} parent=1 // pred_check
      _
    $region39: #{tpu_custom_call.1} parent=1 // pred_check_branch
      %100 = sbr.rel (0) target = $region41
    $region40: #{tpu_custom_call.1} parent=1 // pred_region
      %102 = dma.done [#allocation3], 128
    $region41: #{tpu_custom_call.1} parent=1 // pred_fallthru
      _
    // Predicated region
    $region42: #{tpu_custom_call.1} parent=1 // pred_check
      _
    $region43: #{tpu_custom_call.1} parent=1 // pred_check_branch
      %104 = sbr.rel (0) target = $region45
    $region44: #{tpu_custom_call.1} parent=1 // pred_region
      %106 = dma.done [#allocation6], 4096
    $region45: #{tpu_custom_call.1} parent=1 // pred_fallthru
      _
    // Predicated region
    $region46: #{tpu_custom_call.1} parent=1 // pred_check
      _
    $region47: #{tpu_custom_call.1} parent=1 // pred_check_branch
      %108 = sbr.rel (0) target = $region49
    $region48: #{tpu_custom_call.1} parent=1 // pred_region
      %110 = dma.done [#allocation6], 32
    $region49: #{tpu_custom_call.1} parent=1 // pred_fallthru
      _
    // Predicated region
    $region50: #{tpu_custom_call.1} parent=1 // pred_check
      _
    $region51: #{tpu_custom_call.1} parent=1 // pred_check_branch
      %112 = sbr.rel (0) target = $region53
    $region52: #{tpu_custom_call.1} parent=1 // pred_region
      %114 = dma.done [#allocation9], 8192
    $region53: #{tpu_custom_call.1} parent=1 // pred_fallthru
      _
    // Predicated region
    $region54: #{tpu_custom_call.1} parent=1 // pred_check
      _
    $region55: #{tpu_custom_call.1} parent=1 // pred_check_branch
      %116 = sbr.rel (0) target = $region57
    $region56: #{tpu_custom_call.1} parent=1 // pred_region
      %118 = dma.done [#allocation9], 8192
    $region57: #{tpu_custom_call.1} parent=1 // pred_fallthru
      _
    // Predicated region
    $region58: #{tpu_custom_call.1} parent=1 // pred_check
      _
    $region59: #{tpu_custom_call.1} parent=1 // pred_check_branch
      %120 = sbr.rel (0) target = $region61
    $region60: #{tpu_custom_call.1} parent=1 // pred_region
      %122 = dma.done [#allocation12], 4096
    $region61: #{tpu_custom_call.1} parent=1 // pred_fallthru
      _
    %v123 = vld [vmem:[#allocation2] sm:$0xff]
    %v124 = vld [vmem:[#allocation5] sm:$0xff]
    %v125 = vld [vmem:[#allocation5 + $0x8] sm:$0xff]
    %v126 = vld [vmem:[#allocation5 + $0x10] sm:$0xff]
    %v127 = vld [vmem:[#allocation5 + $0x18] sm:$0xff]
    %v128 = vld [vmem:[#allocation5 + $0x20] sm:$0xff]
    %v129 = vld [vmem:[#allocation5 + $0x28] sm:$0xff]
    %v130 = vld [vmem:[#allocation5 + $0x30] sm:$0xff]
    %v131 = vld [vmem:[#allocation5 + $0x38] sm:$0xff]
    %v132 = vld [vmem:[#allocation5 + $0x40] sm:$0xff]
    %v133 = vld [vmem:[#allocation5 + $0x48] sm:$0xff]
    %v134 = vld [vmem:[#allocation5 + $0x50] sm:$0xff]
    %v135 = vld [vmem:[#allocation5 + $0x58] sm:$0xff]
    %v136 = vld [vmem:[#allocation5 + $0x60] sm:$0xff]
    %v137 = vld [vmem:[#allocation5 + $0x68] sm:$0xff]
    %v138 = vld [vmem:[#allocation5 + $0x70] sm:$0xff]
    %v139 = vld [vmem:[#allocation5 + $0x78] sm:$0xff]
    %v140 = vld [vmem:[#allocation5 + $0x80] sm:$0xff]
    %v141 = vld [vmem:[#allocation5 + $0x88] sm:$0xff]
    %v142 = vld [vmem:[#allocation5 + $0x90] sm:$0xff]
    %v143 = vld [vmem:[#allocation5 + $0x98] sm:$0xff]
    %v144 = vld [vmem:[#allocation5 + $0xa0] sm:$0xff]
    %v145 = vld [vmem:[#allocation5 + $0xa8] sm:$0xff]
    %v146 = vld [vmem:[#allocation5 + $0xb0] sm:$0xff]
    %v147 = vld [vmem:[#allocation5 + $0xb8] sm:$0xff]
    %v148 = vld [vmem:[#allocation5 + $0xc0] sm:$0xff]
    %v149 = vld [vmem:[#allocation5 + $0xc8] sm:$0xff]
    %v150 = vld [vmem:[#allocation5 + $0xd0] sm:$0xff]
    %v151 = vld [vmem:[#allocation5 + $0xd8] sm:$0xff]
    %v152 = vld [vmem:[#allocation5 + $0xe0] sm:$0xff]
    %v153 = vld [vmem:[#allocation5 + $0xe8] sm:$0xff]
    %v154 = vld [vmem:[#allocation5 + $0xf0] sm:$0xff]
    %v155 = vld [vmem:[#allocation5 + $0xf8] sm:$0xff]
    %v156 = vld [vmem:[#allocation7] sm:$0x3]
    %v158 = vperm.slane %v156, 0
    %v159 = vperm.slane %v156, 1
    %162 = vmatpush.msra.mxu0 %v154
    %163 = vmatpush.msra.mxu0 %v152
    %164 = vmatpush.msra.mxu0 %v150
    %165 = vmatpush.msra.mxu0 %v148
    %166 = vmatpush.msra.mxu0 %v146
    %167 = vmatpush.msra.mxu0 %v144
    %168 = vmatpush.msra.mxu0 %v142
    %169 = vmatpush.msra.mxu0 %v140
    %170 = vmatpush.msra.mxu0 %v138
    %171 = vmatpush.msra.mxu0 %v136
    %172 = vmatpush.msra.mxu0 %v134
    %173 = vmatpush.msra.mxu0 %v132
    %174 = vmatpush.msra.mxu0 %v130
    %175 = vmatpush.msra.mxu0 %v128
    %176 = vmatpush.msra.mxu0 %v126
    %177 = vmatpush.msra.mxu0 %v124
    %178 = vmatmul.f32.gmra.mxu0 %v123
    %v179 = vpop.f32.mrf.mxu0
    %v180 = vadd.f32 %v158, %v179
    %181 = vdwg.mxu0
    %182 = vmatpush.msra.mxu0 %v155
    %183 = vmatpush.msra.mxu0 %v153
    %184 = vmatpush.msra.mxu0 %v151
    %185 = vmatpush.msra.mxu0 %v149
    %186 = vmatpush.msra.mxu0 %v147
    %187 = vmatpush.msra.mxu0 %v145
    %188 = vmatpush.msra.mxu0 %v143
    %189 = vmatpush.msra.mxu0 %v141
    %190 = vmatpush.msra.mxu0 %v139
    %191 = vmatpush.msra.mxu0 %v137
    %192 = vmatpush.msra.mxu0 %v135
    %193 = vmatpush.msra.mxu0 %v133
    %194 = vmatpush.msra.mxu0 %v131
    %195 = vmatpush.msra.mxu0 %v129
    %196 = vmatpush.msra.mxu0 %v127
    %197 = vmatpush.msra.mxu0 %v125
    %198 = vmatmul.f32.gmra.mxu0 %v123
    %v199 = vpop.f32.mrf.mxu0
    %v200 = vadd.f32 %v159, %v199
    %201 = vdwg.mxu0
    %v202 = vmax.f32 %v180, 0.0
    %v203 = vmax.f32 %v200, 0.0
    %v204 = vld [vmem:[#allocation8] sm:$0xff]
    %v205 = vld [vmem:[#allocation8 + $0x8] sm:$0xff]
    %v206 = vld [vmem:[#allocation8 + $0x10] sm:$0xff]
    %v207 = vld [vmem:[#allocation8 + $0x18] sm:$0xff]
    %v208 = vld [vmem:[#allocation8 + $0x20] sm:$0xff]
    %v209 = vld [vmem:[#allocation8 + $0x28] sm:$0xff]
    %v210 = vld [vmem:[#allocation8 + $0x30] sm:$0xff]
    %v211 = vld [vmem:[#allocation8 + $0x38] sm:$0xff]
    %v212 = vld [vmem:[#allocation8 + $0x40] sm:$0xff]
    %v213 = vld [vmem:[#allocation8 + $0x48] sm:$0xff]
    %v214 = vld [vmem:[#allocation8 + $0x50] sm:$0xff]
    %v215 = vld [vmem:[#allocation8 + $0x58] sm:$0xff]
    %v216 = vld [vmem:[#allocation8 + $0x60] sm:$0xff]
    %v217 = vld [vmem:[#allocation8 + $0x68] sm:$0xff]
    %v218 = vld [vmem:[#allocation8 + $0x70] sm:$0xff]
    %v219 = vld [vmem:[#allocation8 + $0x78] sm:$0xff]
    %v220 = vld [vmem:[#allocation8 + $0x80] sm:$0xff]
    %v221 = vld [vmem:[#allocation8 + $0x88] sm:$0xff]
    %v222 = vld [vmem:[#allocation8 + $0x90] sm:$0xff]
    %v223 = vld [vmem:[#allocation8 + $0x98] sm:$0xff]
    %v224 = vld [vmem:[#allocation8 + $0xa0] sm:$0xff]
    %v225 = vld [vmem:[#allocation8 + $0xa8] sm:$0xff]
    %v226 = vld [vmem:[#allocation8 + $0xb0] sm:$0xff]
    %v227 = vld [vmem:[#allocation8 + $0xb8] sm:$0xff]
    %v228 = vld [vmem:[#allocation8 + $0xc0] sm:$0xff]
    %v229 = vld [vmem:[#allocation8 + $0xc8] sm:$0xff]
    %v230 = vld [vmem:[#allocation8 + $0xd0] sm:$0xff]
    %v231 = vld [vmem:[#allocation8 + $0xd8] sm:$0xff]
    %v232 = vld [vmem:[#allocation8 + $0xe0] sm:$0xff]
    %v233 = vld [vmem:[#allocation8 + $0xe8] sm:$0xff]
    %v234 = vld [vmem:[#allocation8 + $0xf0] sm:$0xff]
    %v235 = vld [vmem:[#allocation8 + $0xf8] sm:$0xff]
    %v236 = vld [vmem:[#allocation8 + $0x100] sm:$0xff]
    %v237 = vld [vmem:[#allocation8 + $0x108] sm:$0xff]
    %v238 = vld [vmem:[#allocation8 + $0x110] sm:$0xff]
    %v239 = vld [vmem:[#allocation8 + $0x118] sm:$0xff]
    %v240 = vld [vmem:[#allocation8 + $0x120] sm:$0xff]
    %v241 = vld [vmem:[#allocation8 + $0x128] sm:$0xff]
    %v242 = vld [vmem:[#allocation8 + $0x130] sm:$0xff]
    %v243 = vld [vmem:[#allocation8 + $0x138] sm:$0xff]
    %v244 = vld [vmem:[#allocation8 + $0x140] sm:$0xff]
    %v245 = vld [vmem:[#allocation8 + $0x148] sm:$0xff]
    %v246 = vld [vmem:[#allocation8 + $0x150] sm:$0xff]
    %v247 = vld [vmem:[#allocation8 + $0x158] sm:$0xff]
    %v248 = vld [vmem:[#allocation8 + $0x160] sm:$0xff]
    %v249 = vld [vmem:[#allocation8 + $0x168] sm:$0xff]
    %v250 = vld [vmem:[#allocation8 + $0x170] sm:$0xff]
    %v251 = vld [vmem:[#allocation8 + $0x178] sm:$0xff]
    %v252 = vld [vmem:[#allocation8 + $0x180] sm:$0xff]
    %v253 = vld [vmem:[#allocation8 + $0x188] sm:$0xff]
    %v254 = vld [vmem:[#allocation8 + $0x190] sm:$0xff]
    %v255 = vld [vmem:[#allocation8 + $0x198] sm:$0xff]
    %v256 = vld [vmem:[#allocation8 + $0x1a0] sm:$0xff]
    %v257 = vld [vmem:[#allocation8 + $0x1a8] sm:$0xff]
    %v258 = vld [vmem:[#allocation8 + $0x1b0] sm:$0xff]
    %v259 = vld [vmem:[#allocation8 + $0x1b8] sm:$0xff]
    %v260 = vld [vmem:[#allocation8 + $0x1c0] sm:$0xff]
    %v261 = vld [vmem:[#allocation8 + $0x1c8] sm:$0xff]
    %v262 = vld [vmem:[#allocation8 + $0x1d0] sm:$0xff]
    %v263 = vld [vmem:[#allocation8 + $0x1d8] sm:$0xff]
    %v264 = vld [vmem:[#allocation8 + $0x1e0] sm:$0xff]
    %v265 = vld [vmem:[#allocation8 + $0x1e8] sm:$0xff]
    %v266 = vld [vmem:[#allocation8 + $0x1f0] sm:$0xff]
    %v267 = vld [vmem:[#allocation8 + $0x1f8] sm:$0xff]
    %v268 = vld [vmem:[%s4] sm:$0x3]
    %v270 = vperm.slane %v268, 0
    %v271 = vperm.slane %v268, 1
    %274 = vmatpush.msra.mxu0 %v234
    %275 = vmatpush.msra.mxu0 %v232
    %276 = vmatpush.msra.mxu0 %v230
    %277 = vmatpush.msra.mxu0 %v228
    %278 = vmatpush.msra.mxu0 %v226
    %279 = vmatpush.msra.mxu0 %v224
    %280 = vmatpush.msra.mxu0 %v222
    %281 = vmatpush.msra.mxu0 %v220
    %282 = vmatpush.msra.mxu0 %v218
    %283 = vmatpush.msra.mxu0 %v216
    %284 = vmatpush.msra.mxu0 %v214
    %285 = vmatpush.msra.mxu0 %v212
    %286 = vmatpush.msra.mxu0 %v210
    %287 = vmatpush.msra.mxu0 %v208
    %288 = vmatpush.msra.mxu0 %v206
    %289 = vmatpush.msra.mxu0 %v204
    %290 = vmatmul.f32.gmra.mxu0 %v202
    %v291 = vpop.f32.mrf.mxu0
    %v292 = vadd.f32 %v270, %v291
    %293 = vdwg.mxu0
    %294 = vmatpush.msra.mxu0 %v266
    %295 = vmatpush.msra.mxu0 %v264
    %296 = vmatpush.msra.mxu0 %v262
    %297 = vmatpush.msra.mxu0 %v260
    %298 = vmatpush.msra.mxu0 %v258
    %299 = vmatpush.msra.mxu0 %v256
    %300 = vmatpush.msra.mxu0 %v254
    %301 = vmatpush.msra.mxu0 %v252
    %302 = vmatpush.msra.mxu0 %v250
    %303 = vmatpush.msra.mxu0 %v248
    %304 = vmatpush.msra.mxu0 %v246
    %305 = vmatpush.msra.mxu0 %v244
    %306 = vmatpush.msra.mxu0 %v242
    %307 = vmatpush.msra.mxu0 %v240
    %308 = vmatpush.msra.mxu0 %v238
    %309 = vmatpush.msra.mxu0 %v236
    %310 = vmatmul.f32.gmra.mxu0 %v203
    %v311 = vpop.f32.mrf.mxu0
    %v312 = vadd.f32 %v292, %v311
    %313 = vdwg.mxu0
    %314 = vmatpush.msra.mxu0 %v235
    %315 = vmatpush.msra.mxu0 %v233
    %316 = vmatpush.msra.mxu0 %v231
    %317 = vmatpush.msra.mxu0 %v229
    %318 = vmatpush.msra.mxu0 %v227
    %319 = vmatpush.msra.mxu0 %v225
    %320 = vmatpush.msra.mxu0 %v223
    %321 = vmatpush.msra.mxu0 %v221
    %322 = vmatpush.msra.mxu0 %v219
    %323 = vmatpush.msra.mxu0 %v217
    %324 = vmatpush.msra.mxu0 %v215
    %325 = vmatpush.msra.mxu0 %v213
    %326 = vmatpush.msra.mxu0 %v211
    %327 = vmatpush.msra.mxu0 %v209
    %328 = vmatpush.msra.mxu0 %v207
    %329 = vmatpush.msra.mxu0 %v205
    %330 = vmatmul.f32.gmra.mxu0 %v202
    %v331 = vpop.f32.mrf.mxu0
    %v332 = vadd.f32 %v271, %v331
    %333 = vdwg.mxu0
    %334 = vmatpush.msra.mxu0 %v267
    %335 = vmatpush.msra.mxu0 %v265
    %336 = vmatpush.msra.mxu0 %v263
    %337 = vmatpush.msra.mxu0 %v261
    %338 = vmatpush.msra.mxu0 %v259
    %339 = vmatpush.msra.mxu0 %v257
    %340 = vmatpush.msra.mxu0 %v255
    %341 = vmatpush.msra.mxu0 %v253
    %342 = vmatpush.msra.mxu0 %v251
    %343 = vmatpush.msra.mxu0 %v249
    %344 = vmatpush.msra.mxu0 %v247
    %345 = vmatpush.msra.mxu0 %v245
    %346 = vmatpush.msra.mxu0 %v243
    %347 = vmatpush.msra.mxu0 %v241
    %348 = vmatpush.msra.mxu0 %v239
    %349 = vmatpush.msra.mxu0 %v237
    %350 = vmatmul.f32.gmra.mxu0 %v203
    %v351 = vpop.f32.mrf.mxu0
    %v352 = vadd.f32 %v332, %v351
    %353 = vdwg.mxu0
    %v354 = vmax.f32 %v312, 0.0
    %v355 = vmax.f32 %v352, 0.0
    %v356 = vld [vmem:[#allocation10] sm:$0xff]
    %v357 = vld [vmem:[#allocation10 + $0x8] sm:$0xff]
    %v358 = vld [vmem:[#allocation10 + $0x10] sm:$0xff]
    %v359 = vld [vmem:[#allocation10 + $0x18] sm:$0xff]
    %v360 = vld [vmem:[#allocation10 + $0x20] sm:$0xff]
    %v361 = vld [vmem:[#allocation10 + $0x28] sm:$0xff]
    %v362 = vld [vmem:[#allocation10 + $0x30] sm:$0xff]
    %v363 = vld [vmem:[#allocation10 + $0x38] sm:$0xff]
    %v364 = vld [vmem:[#allocation10 + $0x40] sm:$0xff]
    %v365 = vld [vmem:[#allocation10 + $0x48] sm:$0xff]
    %v366 = vld [vmem:[#allocation10 + $0x50] sm:$0xff]
    %v367 = vld [vmem:[#allocation10 + $0x58] sm:$0xff]
    %v368 = vld [vmem:[#allocation10 + $0x60] sm:$0xff]
    %v369 = vld [vmem:[#allocation10 + $0x68] sm:$0xff]
    %v370 = vld [vmem:[#allocation10 + $0x70] sm:$0xff]
    %v371 = vld [vmem:[#allocation10 + $0x78] sm:$0xff]
    %v372 = vld [vmem:[#allocation10 + $0x80] sm:$0xff]
    %v373 = vld [vmem:[#allocation10 + $0x88] sm:$0xff]
    %v374 = vld [vmem:[#allocation10 + $0x90] sm:$0xff]
    %v375 = vld [vmem:[#allocation10 + $0x98] sm:$0xff]
    %v376 = vld [vmem:[#allocation10 + $0xa0] sm:$0xff]
    %v377 = vld [vmem:[#allocation10 + $0xa8] sm:$0xff]
    %v378 = vld [vmem:[#allocation10 + $0xb0] sm:$0xff]
    %v379 = vld [vmem:[#allocation10 + $0xb8] sm:$0xff]
    %v380 = vld [vmem:[#allocation10 + $0xc0] sm:$0xff]
    %v381 = vld [vmem:[#allocation10 + $0xc8] sm:$0xff]
    %v382 = vld [vmem:[#allocation10 + $0xd0] sm:$0xff]
    %v383 = vld [vmem:[#allocation10 + $0xd8] sm:$0xff]
    %v384 = vld [vmem:[#allocation10 + $0xe0] sm:$0xff]
    %v385 = vld [vmem:[#allocation10 + $0xe8] sm:$0xff]
    %v386 = vld [vmem:[#allocation10 + $0xf0] sm:$0xff]
    %v387 = vld [vmem:[#allocation10 + $0xf8] sm:$0xff]
    %v388 = vld [vmem:[#allocation10 + $0x100] sm:$0xff]
    %v389 = vld [vmem:[#allocation10 + $0x108] sm:$0xff]
    %v390 = vld [vmem:[#allocation10 + $0x110] sm:$0xff]
    %v391 = vld [vmem:[#allocation10 + $0x118] sm:$0xff]
    %v392 = vld [vmem:[#allocation10 + $0x120] sm:$0xff]
    %v393 = vld [vmem:[#allocation10 + $0x128] sm:$0xff]
    %v394 = vld [vmem:[#allocation10 + $0x130] sm:$0xff]
    %v395 = vld [vmem:[#allocation10 + $0x138] sm:$0xff]
    %v396 = vld [vmem:[#allocation10 + $0x140] sm:$0xff]
    %v397 = vld [vmem:[#allocation10 + $0x148] sm:$0xff]
    %v398 = vld [vmem:[#allocation10 + $0x150] sm:$0xff]
    %v399 = vld [vmem:[#allocation10 + $0x158] sm:$0xff]
    %v400 = vld [vmem:[#allocation10 + $0x160] sm:$0xff]
    %v401 = vld [vmem:[#allocation10 + $0x168] sm:$0xff]
    %v402 = vld [vmem:[#allocation10 + $0x170] sm:$0xff]
    %v403 = vld [vmem:[#allocation10 + $0x178] sm:$0xff]
    %v404 = vld [vmem:[#allocation10 + $0x180] sm:$0xff]
    %v405 = vld [vmem:[#allocation10 + $0x188] sm:$0xff]
    %v406 = vld [vmem:[#allocation10 + $0x190] sm:$0xff]
    %v407 = vld [vmem:[#allocation10 + $0x198] sm:$0xff]
    %v408 = vld [vmem:[#allocation10 + $0x1a0] sm:$0xff]
    %v409 = vld [vmem:[#allocation10 + $0x1a8] sm:$0xff]
    %v410 = vld [vmem:[#allocation10 + $0x1b0] sm:$0xff]
    %v411 = vld [vmem:[#allocation10 + $0x1b8] sm:$0xff]
    %v412 = vld [vmem:[#allocation10 + $0x1c0] sm:$0xff]
    %v413 = vld [vmem:[#allocation10 + $0x1c8] sm:$0xff]
    %v414 = vld [vmem:[#allocation10 + $0x1d0] sm:$0xff]
    %v415 = vld [vmem:[#allocation10 + $0x1d8] sm:$0xff]
    %v416 = vld [vmem:[#allocation10 + $0x1e0] sm:$0xff]
    %v417 = vld [vmem:[#allocation10 + $0x1e8] sm:$0xff]
    %v418 = vld [vmem:[#allocation10 + $0x1f0] sm:$0xff]
    %v419 = vld [vmem:[#allocation10 + $0x1f8] sm:$0xff]
    %v420 = vld [vmem:[%s6] sm:$0x3]
    %v422 = vperm.slane %v420, 0
    %v423 = vperm.slane %v420, 1
    %426 = vmatpush.msra.mxu0 %v386
    %427 = vmatpush.msra.mxu0 %v384
    %428 = vmatpush.msra.mxu0 %v382
    %429 = vmatpush.msra.mxu0 %v380
    %430 = vmatpush.msra.mxu0 %v378
    %431 = vmatpush.msra.mxu0 %v376
    %432 = vmatpush.msra.mxu0 %v374
    %433 = vmatpush.msra.mxu0 %v372
    %434 = vmatpush.msra.mxu0 %v370
    %435 = vmatpush.msra.mxu0 %v368
    %436 = vmatpush.msra.mxu0 %v366
    %437 = vmatpush.msra.mxu0 %v364
    %438 = vmatpush.msra.mxu0 %v362
    %439 = vmatpush.msra.mxu0 %v360
    %440 = vmatpush.msra.mxu0 %v358
    %441 = vmatpush.msra.mxu0 %v356
    %442 = vmatmul.f32.gmra.mxu0 %v354
    %v443 = vpop.f32.mrf.mxu0
    %v444 = vadd.f32 %v422, %v443
    %445 = vdwg.mxu0
    %446 = vmatpush.msra.mxu0 %v418
    %447 = vmatpush.msra.mxu0 %v416
    %448 = vmatpush.msra.mxu0 %v414
    %449 = vmatpush.msra.mxu0 %v412
    %450 = vmatpush.msra.mxu0 %v410
    %451 = vmatpush.msra.mxu0 %v408
    %452 = vmatpush.msra.mxu0 %v406
    %453 = vmatpush.msra.mxu0 %v404
    %454 = vmatpush.msra.mxu0 %v402
    %455 = vmatpush.msra.mxu0 %v400
    %456 = vmatpush.msra.mxu0 %v398
    %457 = vmatpush.msra.mxu0 %v396
    %458 = vmatpush.msra.mxu0 %v394
    %459 = vmatpush.msra.mxu0 %v392
    %460 = vmatpush.msra.mxu0 %v390
    %461 = vmatpush.msra.mxu0 %v388
    %462 = vmatmul.f32.gmra.mxu0 %v355
    %v463 = vpop.f32.mrf.mxu0
    %v464 = vadd.f32 %v444, %v463
    %465 = vdwg.mxu0
    %466 = vmatpush.msra.mxu0 %v387
    %467 = vmatpush.msra.mxu0 %v385
    %468 = vmatpush.msra.mxu0 %v383
    %469 = vmatpush.msra.mxu0 %v381
    %470 = vmatpush.msra.mxu0 %v379
    %471 = vmatpush.msra.mxu0 %v377
    %472 = vmatpush.msra.mxu0 %v375
    %473 = vmatpush.msra.mxu0 %v373
    %474 = vmatpush.msra.mxu0 %v371
    %475 = vmatpush.msra.mxu0 %v369
    %476 = vmatpush.msra.mxu0 %v367
    %477 = vmatpush.msra.mxu0 %v365
    %478 = vmatpush.msra.mxu0 %v363
    %479 = vmatpush.msra.mxu0 %v361
    %480 = vmatpush.msra.mxu0 %v359
    %481 = vmatpush.msra.mxu0 %v357
    %482 = vmatmul.f32.gmra.mxu0 %v354
    %v483 = vpop.f32.mrf.mxu0
    %v484 = vadd.f32 %v423, %v483
    %485 = vdwg.mxu0
    %486 = vmatpush.msra.mxu0 %v419
    %487 = vmatpush.msra.mxu0 %v417
    %488 = vmatpush.msra.mxu0 %v415
    %489 = vmatpush.msra.mxu0 %v413
    %490 = vmatpush.msra.mxu0 %v411
    %491 = vmatpush.msra.mxu0 %v409
    %492 = vmatpush.msra.mxu0 %v407
    %493 = vmatpush.msra.mxu0 %v405
    %494 = vmatpush.msra.mxu0 %v403
    %495 = vmatpush.msra.mxu0 %v401
    %496 = vmatpush.msra.mxu0 %v399
    %497 = vmatpush.msra.mxu0 %v397
    %498 = vmatpush.msra.mxu0 %v395
    %499 = vmatpush.msra.mxu0 %v393
    %500 = vmatpush.msra.mxu0 %v391
    %501 = vmatpush.msra.mxu0 %v389
    %502 = vmatmul.f32.gmra.mxu0 %v355
    %v503 = vpop.f32.mrf.mxu0
    %v504 = vadd.f32 %v484, %v503
    %505 = vdwg.mxu0
    %v506 = vmax.f32 %v464, 0.0
    %v507 = vmax.f32 %v504, 0.0
    %v508 = vld [vmem:[#allocation11] sm:$0xff]
    %v509 = vld [vmem:[#allocation11 + $0x8] sm:$0xff]
    %v510 = vld [vmem:[#allocation11 + $0x10] sm:$0xff]
    %v511 = vld [vmem:[#allocation11 + $0x18] sm:$0xff]
    %v512 = vld [vmem:[#allocation11 + $0x20] sm:$0xff]
    %v513 = vld [vmem:[#allocation11 + $0x28] sm:$0xff]
    %v514 = vld [vmem:[#allocation11 + $0x30] sm:$0xff]
    %v515 = vld [vmem:[#allocation11 + $0x38] sm:$0xff]
    %v516 = vld [vmem:[#allocation11 + $0x40] sm:$0xff]
    %v517 = vld [vmem:[#allocation11 + $0x48] sm:$0xff]
    %v518 = vld [vmem:[#allocation11 + $0x50] sm:$0xff]
    %v519 = vld [vmem:[#allocation11 + $0x58] sm:$0xff]
    %v520 = vld [vmem:[#allocation11 + $0x60] sm:$0xff]
    %v521 = vld [vmem:[#allocation11 + $0x68] sm:$0xff]
    %v522 = vld [vmem:[#allocation11 + $0x70] sm:$0xff]
    %v523 = vld [vmem:[#allocation11 + $0x78] sm:$0xff]
    %v524 = vld [vmem:[#allocation11 + $0x80] sm:$0xff]
    %v525 = vld [vmem:[#allocation11 + $0x88] sm:$0xff]
    %v526 = vld [vmem:[#allocation11 + $0x90] sm:$0xff]
    %v527 = vld [vmem:[#allocation11 + $0x98] sm:$0xff]
    %v528 = vld [vmem:[#allocation11 + $0xa0] sm:$0xff]
    %v529 = vld [vmem:[#allocation11 + $0xa8] sm:$0xff]
    %v530 = vld [vmem:[#allocation11 + $0xb0] sm:$0xff]
    %v531 = vld [vmem:[#allocation11 + $0xb8] sm:$0xff]
    %v532 = vld [vmem:[#allocation11 + $0xc0] sm:$0xff]
    %v533 = vld [vmem:[#allocation11 + $0xc8] sm:$0xff]
    %v534 = vld [vmem:[#allocation11 + $0xd0] sm:$0xff]
    %v535 = vld [vmem:[#allocation11 + $0xd8] sm:$0xff]
    %v536 = vld [vmem:[#allocation11 + $0xe0] sm:$0xff]
    %v537 = vld [vmem:[#allocation11 + $0xe8] sm:$0xff]
    %v538 = vld [vmem:[#allocation11 + $0xf0] sm:$0xff]
    %v539 = vld [vmem:[#allocation11 + $0xf8] sm:$0xff]
    %v540 = vld [vmem:[%s8] sm:$0x1]
    %v542 = vperm.slane %v540, 0
    %544 = vmatpush.msra.mxu0 %v523
    %545 = vmatpush.msra.mxu0 %v522
    %546 = vmatpush.msra.mxu0 %v521
    %547 = vmatpush.msra.mxu0 %v520
    %548 = vmatpush.msra.mxu0 %v519
    %549 = vmatpush.msra.mxu0 %v518
    %550 = vmatpush.msra.mxu0 %v517
    %551 = vmatpush.msra.mxu0 %v516
    %552 = vmatpush.msra.mxu0 %v515
    %553 = vmatpush.msra.mxu0 %v514
    %554 = vmatpush.msra.mxu0 %v513
    %555 = vmatpush.msra.mxu0 %v512
    %556 = vmatpush.msra.mxu0 %v511
    %557 = vmatpush.msra.mxu0 %v510
    %558 = vmatpush.msra.mxu0 %v509
    %559 = vmatpush.msra.mxu0 %v508
    %560 = vmatmul.f32.gmra.mxu0 %v506
    %v561 = vpop.f32.mrf.mxu0
    %v562 = vadd.f32 %v542, %v561
    %563 = vdwg.mxu0
    %564 = vmatpush.msra.mxu0 %v539
    %565 = vmatpush.msra.mxu0 %v538
    %566 = vmatpush.msra.mxu0 %v537
    %567 = vmatpush.msra.mxu0 %v536
    %568 = vmatpush.msra.mxu0 %v535
    %569 = vmatpush.msra.mxu0 %v534
    %570 = vmatpush.msra.mxu0 %v533
    %571 = vmatpush.msra.mxu0 %v532
    %572 = vmatpush.msra.mxu0 %v531
    %573 = vmatpush.msra.mxu0 %v530
    %574 = vmatpush.msra.mxu0 %v529
    %575 = vmatpush.msra.mxu0 %v528
    %576 = vmatpush.msra.mxu0 %v527
    %577 = vmatpush.msra.mxu0 %v526
    %578 = vmatpush.msra.mxu0 %v525
    %579 = vmatpush.msra.mxu0 %v524
    %580 = vmatmul.f32.gmra.mxu0 %v507
    %v581 = vpop.f32.mrf.mxu0
    %v582 = vadd.f32 %v562, %v581
    %583 = vdwg.mxu0
    %584 = vst [vmem:[#allocation13] sm:$0xff] %v582
    // Predicated region
    $region62: #{tpu_custom_call.1} parent=1 // pred_check
      _
    $region63: #{tpu_custom_call.1} parent=1 // pred_check_branch
      %586 = sbr.rel (0) target = $region65
    $region64: #{tpu_custom_call.1} parent=1 // pred_region
      %588 = vsyncadd [#allocation4], 0
      %s590 = sshll.u32 [#allocation13], 4
      %s591 = int_to_ptr.vmem [resolvable:$true] %s590
      %s592 = sshll.u32 %s9, 4
      %s593 = int_to_ptr.hbm [resolvable:$true] %s592
      %595 = dma.vmem_to_hbm [thread:$0]  %s591, 128, %s593, [#allocation4]
    $region65: #{tpu_custom_call.1} parent=1 // pred_fallthru
      _
    // Predicated region
    $region66: #{tpu_custom_call.1} parent=1 // pred_check
      _
    $region67: #{tpu_custom_call.1} parent=1 // pred_check_branch
      %597 = sbr.rel (0) target = $region69
    $region68: #{tpu_custom_call.1} parent=1 // pred_region
      %599 = dma.done [#allocation4], 128
    $region69: #{tpu_custom_call.1} parent=1 // pred_fallthru
      _
    %600 = vsyncpa [#allocation3], 1
    %601 = vsyncpa [#allocation6], 1
    %602 = vsyncpa [#allocation9], 1
    %603 = vsyncpa [#allocation12], 1
    %604 = vsyncpa [#allocation4], 1

// kernel: tpu_custom_call.1
$region0: #{tpu_custom_call.1}
  #allocation0 [shape = 'u32[]', space=smem, size = 0x4, offset = 0x4, fixed_abs, tag = 'smem constant byte address 0x4 - core index']
  #allocation1 [shape = 'u32[72,128]{1,0:T(1,128)}', space=vmem, size = 0x9000, scoped, tag = 'internal scratch']
  %s0 = inlined_call_operand.hbm [shape: f32[8,128], index: 0, kind: input, shape index: {}]
  %s1 = inlined_call_operand.hbm [shape: f32[128,256], index: 1, kind: input, shape index: {}]
  %s2 = inlined_call_operand.hbm [shape: f32[1,256], index: 2, kind: input, shape index: {}]
  %s3 = inlined_call_operand.hbm [shape: f32[256,256], index: 3, kind: input, shape index: {}]
  %s4 = inlined_call_operand.vmem [shape: f32[1,256], index: 4, kind: input, shape index: {}]
  %s5 = inlined_call_operand.hbm [shape: f32[256,256], index: 5, kind: input, shape index: {}]
  %s6 = inlined_call_operand.vmem [shape: f32[1,256], index: 6, kind: input, shape index: {}]
  %s7 = inlined_call_operand.hbm [shape: f32[256,128], index: 7, kind: input, shape index: {}]
  %s8 = inlined_call_operand.vmem [shape: f32[1,128], index: 8, kind: input, shape index: {}]
  %s9 = inlined_call_operand.hbm [shape: f32[8,128], index: 9, kind: output, shape index: {}]
  %s10 = sld [smem:[#allocation0]]
  $region70: #{tpu_custom_call.1} parent=0
    _
  %s12 = ssub.s32 1, %s10
  %s13 = scalar_select 0, %s12, %s10
  $region1: #{tpu_custom_call.1} parent=0
    #allocation2 [shape = 'u8[4096]{0}', space=vmem, size = 0x1000, scoped, tag = 'input window, operand 0, single buffered']
    #allocation3 [shape = 's32[1]{0}', space=sflag, size = 0x4, scoped, tag = 'scoped memory for tpu_custom_call.1']
    #allocation4 [shape = 's32[1]{0}', space=sflag, size = 0x4, scoped, tag = 'scoped memory for tpu_custom_call.1']
    #allocation5 [shape = 'u8[131072]{0}', space=vmem, size = 0x20000, scoped, tag = 'input window, operand 1, single buffered']
    #allocation6 [shape = 's32[1]{0}', space=sflag, size = 0x4, scoped, tag = 'scoped memory for tpu_custom_call.1']
    #allocation7 [shape = 'u8[1024]{0}', space=vmem, size = 0x400, scoped, tag = 'input window, operand 2, single buffered']
    #allocation8 [shape = 'u8[262144]{0}', space=vmem, size = 0x40000, scoped, tag = 'input window, operand 3, single buffered']
    #allocation9 [shape = 's32[1]{0}', space=sflag, size = 0x4, scoped, tag = 'scoped memory for tpu_custom_call.1']
    #allocation10 [shape = 'u8[262144]{0}', space=vmem, size = 0x40000, scoped, tag = 'input window, operand 5, single buffered']
    #allocation11 [shape = 'u8[131072]{0}', space=vmem, size = 0x20000, scoped, tag = 'input window, operand 7, single buffered']
    #allocation12 [shape = 's32[1]{0}', space=sflag, size = 0x4, scoped, tag = 'scoped memory for tpu_custom_call.1']
    #allocation13 [shape = 'u8[4096]{0}', space=vmem, size = 0x1000, scoped, tag = 'output window, operand 0, single buffered']
    %14 = vsyncpa [#allocation3], 0
    %15 = vsyncpa [#allocation6], 0
    %16 = vsyncpa [#allocation9], 0
    %17 = vsyncpa [#allocation12], 0
    %18 = vsyncpa [#allocation4], 0
    // Predicated region
    $region2: #{tpu_custom_call.1} parent=1 // pred_check
      _
    $region3: #{tpu_custom_call.1} parent=1 // pred_check_branch
      %20 = sbr.rel (0) target = $region5
    $region4: #{tpu_custom_call.1} parent=1 // pred_region
      %22 = vsyncadd [#allocation3], 0
      %s24 = sshll.u32 %s0, 4
      %s25 = int_to_ptr.hbm [resolvable:$true] %s24
      %s26 = sshll.u32 [#allocation2], 4
      %s27 = int_to_ptr.vmem [resolvable:$true] %s26
      %29 = dma.hbm_to_vmem [thread:$0]  %s25, 128, %s27, [#allocation3]
    $region5: #{tpu_custom_call.1} parent=1 // pred_fallthru
      _
    // Predicated region
    $region6: #{tpu_custom_call.1} parent=1 // pred_check
      _
    $region7: #{tpu_custom_call.1} parent=1 // pred_check_branch
      %31 = sbr.rel (0) target = $region9
    $region8: #{tpu_custom_call.1} parent=1 // pred_region
      %33 = vsyncadd [#allocation6], 0
      %s34 = sshll.u32 %s1, 4
      %s35 = int_to_ptr.hbm [resolvable:$true] %s34
      %s36 = sshll.u32 [#allocation5], 4
      %s37 = int_to_ptr.vmem [resolvable:$true] %s36
      %42 = dma.hbm_to_vmem [thread:$0]  %s35, 4096, %s37, [#allocation6], 256, 256, 16
    $region9: #{tpu_custom_call.1} parent=1 // pred_fallthru
      _
    // Predicated region
    $region10: #{tpu_custom_call.1} parent=1 // pred_check
      _
    $region11: #{tpu_custom_call.1} parent=1 // pred_check_branch
      %44 = sbr.rel (0) target = $region13
    $region12: #{tpu_custom_call.1} parent=1 // pred_region
      %46 = vsyncadd [#allocation6], 0
      %s48 = sshll.u32 %s2, 4
      %s49 = int_to_ptr.hbm [resolvable:$true] %s48
      %s50 = sshll.u32 [#allocation7], 4
      %s51 = int_to_ptr.vmem [resolvable:$true] %s50
      %53 = dma.hbm_to_vmem [thread:$0]  %s49, 32, %s51, [#allocation6]
    $region13: #{tpu_custom_call.1} parent=1 // pred_fallthru
      _
    // Predicated region
    $region14: #{tpu_custom_call.1} parent=1 // pred_check
      _
    $region15: #{tpu_custom_call.1} parent=1 // pred_check_branch
      %55 = sbr.rel (0) target = $region17
    $region16: #{tpu_custom_call.1} parent=1 // pred_region
      %57 = vsyncadd [#allocation9], 0
      %s58 = sshll.u32 %s3, 4
      %s59 = int_to_ptr.hbm [resolvable:$true] %s58
      %s60 = sshll.u32 [#allocation8], 4
      %s61 = int_to_ptr.vmem [resolvable:$true] %s60
      %66 = dma.hbm_to_vmem [thread:$0]  %s59, 8192, %s61, [#allocation9], 256, 256, 16
    $region17: #{tpu_custom_call.1} parent=1 // pred_fallthru
      _
    // Predicated region
    $region18: #{tpu_custom_call.1} parent=1 // pred_check
      _
    $region19: #{tpu_custom_call.1} parent=1 // pred_check_branch
      %68 = sbr.rel (0) target = $region21
    $region20: #{tpu_custom_call.1} parent=1 // pred_region
      _
    $region21: #{tpu_custom_call.1} parent=1 // pred_fallthru
      _
    // Predicated region
    $region22: #{tpu_custom_call.1} parent=1 // pred_check
      _
    $region23: #{tpu_custom_call.1} parent=1 // pred_check_branch
      %70 = sbr.rel (0) target = $region25
    $region24: #{tpu_custom_call.1} parent=1 // pred_region
      %72 = vsyncadd [#allocation9], 0
      %s73 = sshll.u32 %s5, 4
      %s74 = int_to_ptr.hbm [resolvable:$true] %s73
      %s75 = sshll.u32 [#allocation10], 4
      %s76 = int_to_ptr.vmem [resolvable:$true] %s75
      %81 = dma.hbm_to_vmem [thread:$0]  %s74, 8192, %s76, [#allocation9], 256, 256, 16
    $region25: #{tpu_custom_call.1} parent=1 // pred_fallthru
      _
    // Predicated region
    $region26: #{tpu_custom_call.1} parent=1 // pred_check
      _
    $region27: #{tpu_custom_call.1} parent=1 // pred_check_branch
      %83 = sbr.rel (0) target = $region29
    $region28: #{tpu_custom_call.1} parent=1 // pred_region
      _
    $region29: #{tpu_custom_call.1} parent=1 // pred_fallthru
      _
    // Predicated region
    $region30: #{tpu_custom_call.1} parent=1 // pred_check
      _
    $region31: #{tpu_custom_call.1} parent=1 // pred_check_branch
      %85 = sbr.rel (0) target = $region33
    $region32: #{tpu_custom_call.1} parent=1 // pred_region
      %87 = vsyncadd [#allocation12], 0
      %s88 = sshll.u32 %s7, 4
      %s89 = int_to_ptr.hbm [resolvable:$true] %s88
      %s90 = sshll.u32 [#allocation11], 4
      %s91 = int_to_ptr.vmem [resolvable:$true] %s90
      %96 = dma.hbm_to_vmem [thread:$0]  %s89, 4096, %s91, [#allocation12], 128, 128, 8
    $region33: #{tpu_custom_call.1} parent=1 // pred_fallthru
      _
    // Predicated region
    $region34: #{tpu_custom_call.1} parent=1 // pred_check
      _
    $region35: #{tpu_custom_call.1} parent=1 // pred_check_branch
      %98 = sbr.rel (0) target = $region37
    $region36: #{tpu_custom_call.1} parent=1 // pred_region
      _
    $region37: #{tpu_custom_call.1} parent=1 // pred_fallthru
      _
    // Predicated region
    $region38: #{tpu_custom_call.1} parent=1 // pred_check
      _
    $region39: #{tpu_custom_call.1} parent=1 // pred_check_branch
      %100 = sbr.rel (0) target = $region41
    $region40: #{tpu_custom_call.1} parent=1 // pred_region
      %102 = dma.done [#allocation3], 128
    $region41: #{tpu_custom_call.1} parent=1 // pred_fallthru
      _
    // Predicated region
    $region42: #{tpu_custom_call.1} parent=1 // pred_check
      _
    $region43: #{tpu_custom_call.1} parent=1 // pred_check_branch
      %104 = sbr.rel (0) target = $region45
    $region44: #{tpu_custom_call.1} parent=1 // pred_region
      %106 = dma.done [#allocation6], 4096
    $region45: #{tpu_custom_call.1} parent=1 // pred_fallthru
      _
    // Predicated region
    $region46: #{tpu_custom_call.1} parent=1 // pred_check
      _
    $region47: #{tpu_custom_call.1} parent=1 // pred_check_branch
      %108 = sbr.rel (0) target = $region49
    $region48: #{tpu_custom_call.1} parent=1 // pred_region
      %110 = dma.done [#allocation6], 32
    $region49: #{tpu_custom_call.1} parent=1 // pred_fallthru
      _
    // Predicated region
    $region50: #{tpu_custom_call.1} parent=1 // pred_check
      _
    $region51: #{tpu_custom_call.1} parent=1 // pred_check_branch
      %112 = sbr.rel (0) target = $region53
    $region52: #{tpu_custom_call.1} parent=1 // pred_region
      %114 = dma.done [#allocation9], 8192
    $region53: #{tpu_custom_call.1} parent=1 // pred_fallthru
      _
    // Predicated region
    $region54: #{tpu_custom_call.1} parent=1 // pred_check
      _
    $region55: #{tpu_custom_call.1} parent=1 // pred_check_branch
      %116 = sbr.rel (0) target = $region57
    $region56: #{tpu_custom_call.1} parent=1 // pred_region
      %118 = dma.done [#allocation9], 8192
    $region57: #{tpu_custom_call.1} parent=1 // pred_fallthru
      _
    // Predicated region
    $region58: #{tpu_custom_call.1} parent=1 // pred_check
      _
    $region59: #{tpu_custom_call.1} parent=1 // pred_check_branch
      %120 = sbr.rel (0) target = $region61
    $region60: #{tpu_custom_call.1} parent=1 // pred_region
      %122 = dma.done [#allocation12], 4096
    $region61: #{tpu_custom_call.1} parent=1 // pred_fallthru
      _
    %v123 = vld [vmem:[#allocation2] sm:$0xff]
    %v124 = vld [vmem:[#allocation5] sm:$0xff]
    %v125 = vld [vmem:[#allocation5 + $0x8] sm:$0xff]
    %v126 = vld [vmem:[#allocation5 + $0x10] sm:$0xff]
    %v127 = vld [vmem:[#allocation5 + $0x18] sm:$0xff]
    %v128 = vld [vmem:[#allocation5 + $0x20] sm:$0xff]
    %v129 = vld [vmem:[#allocation5 + $0x28] sm:$0xff]
    %v130 = vld [vmem:[#allocation5 + $0x30] sm:$0xff]
    %v131 = vld [vmem:[#allocation5 + $0x38] sm:$0xff]
    %v132 = vld [vmem:[#allocation5 + $0x40] sm:$0xff]
    %v133 = vld [vmem:[#allocation5 + $0x48] sm:$0xff]
    %v134 = vld [vmem:[#allocation5 + $0x50] sm:$0xff]
    %v135 = vld [vmem:[#allocation5 + $0x58] sm:$0xff]
    %v136 = vld [vmem:[#allocation5 + $0x60] sm:$0xff]
    %v137 = vld [vmem:[#allocation5 + $0x68] sm:$0xff]
    %v138 = vld [vmem:[#allocation5 + $0x70] sm:$0xff]
    %v139 = vld [vmem:[#allocation5 + $0x78] sm:$0xff]
    %v140 = vld [vmem:[#allocation5 + $0x80] sm:$0xff]
    %v141 = vld [vmem:[#allocation5 + $0x88] sm:$0xff]
    %v142 = vld [vmem:[#allocation5 + $0x90] sm:$0xff]
    %v143 = vld [vmem:[#allocation5 + $0x98] sm:$0xff]
    %v144 = vld [vmem:[#allocation5 + $0xa0] sm:$0xff]
    %v145 = vld [vmem:[#allocation5 + $0xa8] sm:$0xff]
    %v146 = vld [vmem:[#allocation5 + $0xb0] sm:$0xff]
    %v147 = vld [vmem:[#allocation5 + $0xb8] sm:$0xff]
    %v148 = vld [vmem:[#allocation5 + $0xc0] sm:$0xff]
    %v149 = vld [vmem:[#allocation5 + $0xc8] sm:$0xff]
    %v150 = vld [vmem:[#allocation5 + $0xd0] sm:$0xff]
    %v151 = vld [vmem:[#allocation5 + $0xd8] sm:$0xff]
    %v152 = vld [vmem:[#allocation5 + $0xe0] sm:$0xff]
    %v153 = vld [vmem:[#allocation5 + $0xe8] sm:$0xff]
    %v154 = vld [vmem:[#allocation5 + $0xf0] sm:$0xff]
    %v155 = vld [vmem:[#allocation5 + $0xf8] sm:$0xff]
    %v156 = vld [vmem:[#allocation7] sm:$0x3]
    %v158 = vperm.slane %v156, 0
    %v159 = vperm.slane %v156, 1
    %162 = vmatpush.msra.mxu0 %v154
    %163 = vmatpush.msra.mxu0 %v152
    %164 = vmatpush.msra.mxu0 %v150
    %165 = vmatpush.msra.mxu0 %v148
    %166 = vmatpush.msra.mxu0 %v146
    %167 = vmatpush.msra.mxu0 %v144
    %168 = vmatpush.msra.mxu0 %v142
    %169 = vmatpush.msra.mxu0 %v140
    %170 = vmatpush.msra.mxu0 %v138
    %171 = vmatpush.msra.mxu0 %v136
    %172 = vmatpush.msra.mxu0 %v134
    %173 = vmatpush.msra.mxu0 %v132
    %174 = vmatpush.msra.mxu0 %v130
    %175 = vmatpush.msra.mxu0 %v128
    %176 = vmatpush.msra.mxu0 %v126
    %177 = vmatpush.msra.mxu0 %v124
    %178 = vmatmul.f32.gmra.mxu0 %v123
    %v179 = vpop.f32.mrf.mxu0
    %v180 = vadd.f32 %v158, %v179
    %181 = vdwg.mxu0
    %182 = vmatpush.msra.mxu0 %v155
    %183 = vmatpush.msra.mxu0 %v153
    %184 = vmatpush.msra.mxu0 %v151
    %185 = vmatpush.msra.mxu0 %v149
    %186 = vmatpush.msra.mxu0 %v147
    %187 = vmatpush.msra.mxu0 %v145
    %188 = vmatpush.msra.mxu0 %v143
    %189 = vmatpush.msra.mxu0 %v141
    %190 = vmatpush.msra.mxu0 %v139
    %191 = vmatpush.msra.mxu0 %v137
    %192 = vmatpush.msra.mxu0 %v135
    %193 = vmatpush.msra.mxu0 %v133
    %194 = vmatpush.msra.mxu0 %v131
    %195 = vmatpush.msra.mxu0 %v129
    %196 = vmatpush.msra.mxu0 %v127
    %197 = vmatpush.msra.mxu0 %v125
    %198 = vmatmul.f32.gmra.mxu0 %v123
    %v199 = vpop.f32.mrf.mxu0
    %v200 = vadd.f32 %v159, %v199
    %201 = vdwg.mxu0
    %v202 = vmax.f32 %v180, 0.0
    %v203 = vmax.f32 %v200, 0.0
    %v204 = vld [vmem:[#allocation8] sm:$0xff]
    %v205 = vld [vmem:[#allocation8 + $0x8] sm:$0xff]
    %v206 = vld [vmem:[#allocation8 + $0x10] sm:$0xff]
    %v207 = vld [vmem:[#allocation8 + $0x18] sm:$0xff]
    %v208 = vld [vmem:[#allocation8 + $0x20] sm:$0xff]
    %v209 = vld [vmem:[#allocation8 + $0x28] sm:$0xff]
    %v210 = vld [vmem:[#allocation8 + $0x30] sm:$0xff]
    %v211 = vld [vmem:[#allocation8 + $0x38] sm:$0xff]
    %v212 = vld [vmem:[#allocation8 + $0x40] sm:$0xff]
    %v213 = vld [vmem:[#allocation8 + $0x48] sm:$0xff]
    %v214 = vld [vmem:[#allocation8 + $0x50] sm:$0xff]
    %v215 = vld [vmem:[#allocation8 + $0x58] sm:$0xff]
    %v216 = vld [vmem:[#allocation8 + $0x60] sm:$0xff]
    %v217 = vld [vmem:[#allocation8 + $0x68] sm:$0xff]
    %v218 = vld [vmem:[#allocation8 + $0x70] sm:$0xff]
    %v219 = vld [vmem:[#allocation8 + $0x78] sm:$0xff]
    %v220 = vld [vmem:[#allocation8 + $0x80] sm:$0xff]
    %v221 = vld [vmem:[#allocation8 + $0x88] sm:$0xff]
    %v222 = vld [vmem:[#allocation8 + $0x90] sm:$0xff]
    %v223 = vld [vmem:[#allocation8 + $0x98] sm:$0xff]
    %v224 = vld [vmem:[#allocation8 + $0xa0] sm:$0xff]
    %v225 = vld [vmem:[#allocation8 + $0xa8] sm:$0xff]
    %v226 = vld [vmem:[#allocation8 + $0xb0] sm:$0xff]
    %v227 = vld [vmem:[#allocation8 + $0xb8] sm:$0xff]
    %v228 = vld [vmem:[#allocation8 + $0xc0] sm:$0xff]
    %v229 = vld [vmem:[#allocation8 + $0xc8] sm:$0xff]
    %v230 = vld [vmem:[#allocation8 + $0xd0] sm:$0xff]
    %v231 = vld [vmem:[#allocation8 + $0xd8] sm:$0xff]
    %v232 = vld [vmem:[#allocation8 + $0xe0] sm:$0xff]
    %v233 = vld [vmem:[#allocation8 + $0xe8] sm:$0xff]
    %v234 = vld [vmem:[#allocation8 + $0xf0] sm:$0xff]
    %v235 = vld [vmem:[#allocation8 + $0xf8] sm:$0xff]
    %v236 = vld [vmem:[#allocation8 + $0x100] sm:$0xff]
    %v237 = vld [vmem:[#allocation8 + $0x108] sm:$0xff]
    %v238 = vld [vmem:[#allocation8 + $0x110] sm:$0xff]
    %v239 = vld [vmem:[#allocation8 + $0x118] sm:$0xff]
    %v240 = vld [vmem:[#allocation8 + $0x120] sm:$0xff]
    %v241 = vld [vmem:[#allocation8 + $0x128] sm:$0xff]
    %v242 = vld [vmem:[#allocation8 + $0x130] sm:$0xff]
    %v243 = vld [vmem:[#allocation8 + $0x138] sm:$0xff]
    %v244 = vld [vmem:[#allocation8 + $0x140] sm:$0xff]
    %v245 = vld [vmem:[#allocation8 + $0x148] sm:$0xff]
    %v246 = vld [vmem:[#allocation8 + $0x150] sm:$0xff]
    %v247 = vld [vmem:[#allocation8 + $0x158] sm:$0xff]
    %v248 = vld [vmem:[#allocation8 + $0x160] sm:$0xff]
    %v249 = vld [vmem:[#allocation8 + $0x168] sm:$0xff]
    %v250 = vld [vmem:[#allocation8 + $0x170] sm:$0xff]
    %v251 = vld [vmem:[#allocation8 + $0x178] sm:$0xff]
    %v252 = vld [vmem:[#allocation8 + $0x180] sm:$0xff]
    %v253 = vld [vmem:[#allocation8 + $0x188] sm:$0xff]
    %v254 = vld [vmem:[#allocation8 + $0x190] sm:$0xff]
    %v255 = vld [vmem:[#allocation8 + $0x198] sm:$0xff]
    %v256 = vld [vmem:[#allocation8 + $0x1a0] sm:$0xff]
    %v257 = vld [vmem:[#allocation8 + $0x1a8] sm:$0xff]
    %v258 = vld [vmem:[#allocation8 + $0x1b0] sm:$0xff]
    %v259 = vld [vmem:[#allocation8 + $0x1b8] sm:$0xff]
    %v260 = vld [vmem:[#allocation8 + $0x1c0] sm:$0xff]
    %v261 = vld [vmem:[#allocation8 + $0x1c8] sm:$0xff]
    %v262 = vld [vmem:[#allocation8 + $0x1d0] sm:$0xff]
    %v263 = vld [vmem:[#allocation8 + $0x1d8] sm:$0xff]
    %v264 = vld [vmem:[#allocation8 + $0x1e0] sm:$0xff]
    %v265 = vld [vmem:[#allocation8 + $0x1e8] sm:$0xff]
    %v266 = vld [vmem:[#allocation8 + $0x1f0] sm:$0xff]
    %v267 = vld [vmem:[#allocation8 + $0x1f8] sm:$0xff]
    %v268 = vld [vmem:[%s4] sm:$0x3]
    %v270 = vperm.slane %v268, 0
    %v271 = vperm.slane %v268, 1
    %274 = vmatpush.msra.mxu0 %v234
    %275 = vmatpush.msra.mxu0 %v232
    %276 = vmatpush.msra.mxu0 %v230
    %277 = vmatpush.msra.mxu0 %v228
    %278 = vmatpush.msra.mxu0 %v226
    %279 = vmatpush.msra.mxu0 %v224
    %280 = vmatpush.msra.mxu0 %v222
    %281 = vmatpush.msra.mxu0 %v220
    %282 = vmatpush.msra.mxu0 %v218
    %283 = vmatpush.msra.mxu0 %v216
    %284 = vmatpush.msra.mxu0 %v214
    %285 = vmatpush.msra.mxu0 %v212
    %286 = vmatpush.msra.mxu0 %v210
    %287 = vmatpush.msra.mxu0 %v208
    %288 = vmatpush.msra.mxu0 %v206
    %289 = vmatpush.msra.mxu0 %v204
    %290 = vmatmul.f32.gmra.mxu0 %v202
    %v291 = vpop.f32.mrf.mxu0
    %v292 = vadd.f32 %v270, %v291
    %293 = vdwg.mxu0
    %294 = vmatpush.msra.mxu0 %v266
    %295 = vmatpush.msra.mxu0 %v264
    %296 = vmatpush.msra.mxu0 %v262
    %297 = vmatpush.msra.mxu0 %v260
    %298 = vmatpush.msra.mxu0 %v258
    %299 = vmatpush.msra.mxu0 %v256
    %300 = vmatpush.msra.mxu0 %v254
    %301 = vmatpush.msra.mxu0 %v252
    %302 = vmatpush.msra.mxu0 %v250
    %303 = vmatpush.msra.mxu0 %v248
    %304 = vmatpush.msra.mxu0 %v246
    %305 = vmatpush.msra.mxu0 %v244
    %306 = vmatpush.msra.mxu0 %v242
    %307 = vmatpush.msra.mxu0 %v240
    %308 = vmatpush.msra.mxu0 %v238
    %309 = vmatpush.msra.mxu0 %v236
    %310 = vmatmul.f32.gmra.mxu0 %v203
    %v311 = vpop.f32.mrf.mxu0
    %v312 = vadd.f32 %v292, %v311
    %313 = vdwg.mxu0
    %314 = vmatpush.msra.mxu0 %v235
    %315 = vmatpush.msra.mxu0 %v233
    %316 = vmatpush.msra.mxu0 %v231
    %317 = vmatpush.msra.mxu0 %v229
    %318 = vmatpush.msra.mxu0 %v227
    %319 = vmatpush.msra.mxu0 %v225
    %320 = vmatpush.msra.mxu0 %v223
    %321 = vmatpush.msra.mxu0 %v221
    %322 = vmatpush.msra.mxu0 %v219
    %323 = vmatpush.msra.mxu0 %v217
    %324 = vmatpush.msra.mxu0 %v215
    %325 = vmatpush.msra.mxu0 %v213
    %326 = vmatpush.msra.mxu0 %v211
    %327 = vmatpush.msra.mxu0 %v209
    %328 = vmatpush.msra.mxu0 %v207
    %329 = vmatpush.msra.mxu0 %v205
    %330 = vmatmul.f32.gmra.mxu0 %v202
    %v331 = vpop.f32.mrf.mxu0
    %v332 = vadd.f32 %v271, %v331
    %333 = vdwg.mxu0
    %334 = vmatpush.msra.mxu0 %v267
    %335 = vmatpush.msra.mxu0 %v265
    %336 = vmatpush.msra.mxu0 %v263
    %337 = vmatpush.msra.mxu0 %v261
    %338 = vmatpush.msra.mxu0 %v259
    %339 = vmatpush.msra.mxu0 %v257
    %340 = vmatpush.msra.mxu0 %v255
    %341 = vmatpush.msra.mxu0 %v253
    %342 = vmatpush.msra.mxu0 %v251
    %343 = vmatpush.msra.mxu0 %v249
    %344 = vmatpush.msra.mxu0 %v247
    %345 = vmatpush.msra.mxu0 %v245
    %346 = vmatpush.msra.mxu0 %v243
    %347 = vmatpush.msra.mxu0 %v241
    %348 = vmatpush.msra.mxu0 %v239
    %349 = vmatpush.msra.mxu0 %v237
    %350 = vmatmul.f32.gmra.mxu0 %v203
    %v351 = vpop.f32.mrf.mxu0
    %v352 = vadd.f32 %v332, %v351
    %353 = vdwg.mxu0
    %v354 = vmax.f32 %v312, 0.0
    %v355 = vmax.f32 %v352, 0.0
    %v356 = vld [vmem:[#allocation10] sm:$0xff]
    %v357 = vld [vmem:[#allocation10 + $0x8] sm:$0xff]
    %v358 = vld [vmem:[#allocation10 + $0x10] sm:$0xff]
    %v359 = vld [vmem:[#allocation10 + $0x18] sm:$0xff]
    %v360 = vld [vmem:[#allocation10 + $0x20] sm:$0xff]
    %v361 = vld [vmem:[#allocation10 + $0x28] sm:$0xff]
    %v362 = vld [vmem:[#allocation10 + $0x30] sm:$0xff]
    %v363 = vld [vmem:[#allocation10 + $0x38] sm:$0xff]
    %v364 = vld [vmem:[#allocation10 + $0x40] sm:$0xff]
    %v365 = vld [vmem:[#allocation10 + $0x48] sm:$0xff]
    %v366 = vld [vmem:[#allocation10 + $0x50] sm:$0xff]
    %v367 = vld [vmem:[#allocation10 + $0x58] sm:$0xff]
    %v368 = vld [vmem:[#allocation10 + $0x60] sm:$0xff]
    %v369 = vld [vmem:[#allocation10 + $0x68] sm:$0xff]
    %v370 = vld [vmem:[#allocation10 + $0x70] sm:$0xff]
    %v371 = vld [vmem:[#allocation10 + $0x78] sm:$0xff]
    %v372 = vld [vmem:[#allocation10 + $0x80] sm:$0xff]
    %v373 = vld [vmem:[#allocation10 + $0x88] sm:$0xff]
    %v374 = vld [vmem:[#allocation10 + $0x90] sm:$0xff]
    %v375 = vld [vmem:[#allocation10 + $0x98] sm:$0xff]
    %v376 = vld [vmem:[#allocation10 + $0xa0] sm:$0xff]
    %v377 = vld [vmem:[#allocation10 + $0xa8] sm:$0xff]
    %v378 = vld [vmem:[#allocation10 + $0xb0] sm:$0xff]
    %v379 = vld [vmem:[#allocation10 + $0xb8] sm:$0xff]
    %v380 = vld [vmem:[#allocation10 + $0xc0] sm:$0xff]
    %v381 = vld [vmem:[#allocation10 + $0xc8] sm:$0xff]
    %v382 = vld [vmem:[#allocation10 + $0xd0] sm:$0xff]
    %v383 = vld [vmem:[#allocation10 + $0xd8] sm:$0xff]
    %v384 = vld [vmem:[#allocation10 + $0xe0] sm:$0xff]
    %v385 = vld [vmem:[#allocation10 + $0xe8] sm:$0xff]
    %v386 = vld [vmem:[#allocation10 + $0xf0] sm:$0xff]
    %v387 = vld [vmem:[#allocation10 + $0xf8] sm:$0xff]
    %v388 = vld [vmem:[#allocation10 + $0x100] sm:$0xff]
    %v389 = vld [vmem:[#allocation10 + $0x108] sm:$0xff]
    %v390 = vld [vmem:[#allocation10 + $0x110] sm:$0xff]
    %v391 = vld [vmem:[#allocation10 + $0x118] sm:$0xff]
    %v392 = vld [vmem:[#allocation10 + $0x120] sm:$0xff]
    %v393 = vld [vmem:[#allocation10 + $0x128] sm:$0xff]
    %v394 = vld [vmem:[#allocation10 + $0x130] sm:$0xff]
    %v395 = vld [vmem:[#allocation10 + $0x138] sm:$0xff]
    %v396 = vld [vmem:[#allocation10 + $0x140] sm:$0xff]
    %v397 = vld [vmem:[#allocation10 + $0x148] sm:$0xff]
    %v398 = vld [vmem:[#allocation10 + $0x150] sm:$0xff]
    %v399 = vld [vmem:[#allocation10 + $0x158] sm:$0xff]
    %v400 = vld [vmem:[#allocation10 + $0x160] sm:$0xff]
    %v401 = vld [vmem:[#allocation10 + $0x168] sm:$0xff]
    %v402 = vld [vmem:[#allocation10 + $0x170] sm:$0xff]
    %v403 = vld [vmem:[#allocation10 + $0x178] sm:$0xff]
    %v404 = vld [vmem:[#allocation10 + $0x180] sm:$0xff]
    %v405 = vld [vmem:[#allocation10 + $0x188] sm:$0xff]
    %v406 = vld [vmem:[#allocation10 + $0x190] sm:$0xff]
    %v407 = vld [vmem:[#allocation10 + $0x198] sm:$0xff]
    %v408 = vld [vmem:[#allocation10 + $0x1a0] sm:$0xff]
    %v409 = vld [vmem:[#allocation10 + $0x1a8] sm:$0xff]
    %v410 = vld [vmem:[#allocation10 + $0x1b0] sm:$0xff]
    %v411 = vld [vmem:[#allocation10 + $0x1b8] sm:$0xff]
    %v412 = vld [vmem:[#allocation10 + $0x1c0] sm:$0xff]
    %v413 = vld [vmem:[#allocation10 + $0x1c8] sm:$0xff]
    %v414 = vld [vmem:[#allocation10 + $0x1d0] sm:$0xff]
    %v415 = vld [vmem:[#allocation10 + $0x1d8] sm:$0xff]
    %v416 = vld [vmem:[#allocation10 + $0x1e0] sm:$0xff]
    %v417 = vld [vmem:[#allocation10 + $0x1e8] sm:$0xff]
    %v418 = vld [vmem:[#allocation10 + $0x1f0] sm:$0xff]
    %v419 = vld [vmem:[#allocation10 + $0x1f8] sm:$0xff]
    %v420 = vld [vmem:[%s6] sm:$0x3]
    %v422 = vperm.slane %v420, 0
    %v423 = vperm.slane %v420, 1
    %426 = vmatpush.msra.mxu0 %v386
    %427 = vmatpush.msra.mxu0 %v384
    %428 = vmatpush.msra.mxu0 %v382
    %429 = vmatpush.msra.mxu0 %v380
    %430 = vmatpush.msra.mxu0 %v378
    %431 = vmatpush.msra.mxu0 %v376
    %432 = vmatpush.msra.mxu0 %v374
    %433 = vmatpush.msra.mxu0 %v372
    %434 = vmatpush.msra.mxu0 %v370
    %435 = vmatpush.msra.mxu0 %v368
    %436 = vmatpush.msra.mxu0 %v366
    %437 = vmatpush.msra.mxu0 %v364
    %438 = vmatpush.msra.mxu0 %v362
    %439 = vmatpush.msra.mxu0 %v360
    %440 = vmatpush.msra.mxu0 %v358
    %441 = vmatpush.msra.mxu0 %v356
    %442 = vmatmul.f32.gmra.mxu0 %v354
    %v443 = vpop.f32.mrf.mxu0
    %v444 = vadd.f32 %v422, %v443
    %445 = vdwg.mxu0
    %446 = vmatpush.msra.mxu0 %v418
    %447 = vmatpush.msra.mxu0 %v416
    %448 = vmatpush.msra.mxu0 %v414
    %449 = vmatpush.msra.mxu0 %v412
    %450 = vmatpush.msra.mxu0 %v410
    %451 = vmatpush.msra.mxu0 %v408
    %452 = vmatpush.msra.mxu0 %v406
    %453 = vmatpush.msra.mxu0 %v404
    %454 = vmatpush.msra.mxu0 %v402
    %455 = vmatpush.msra.mxu0 %v400
    %456 = vmatpush.msra.mxu0 %v398
    %457 = vmatpush.msra.mxu0 %v396
    %458 = vmatpush.msra.mxu0 %v394
    %459 = vmatpush.msra.mxu0 %v392
    %460 = vmatpush.msra.mxu0 %v390
    %461 = vmatpush.msra.mxu0 %v388
    %462 = vmatmul.f32.gmra.mxu0 %v355
    %v463 = vpop.f32.mrf.mxu0
    %v464 = vadd.f32 %v444, %v463
    %465 = vdwg.mxu0
    %466 = vmatpush.msra.mxu0 %v387
    %467 = vmatpush.msra.mxu0 %v385
    %468 = vmatpush.msra.mxu0 %v383
    %469 = vmatpush.msra.mxu0 %v381
    %470 = vmatpush.msra.mxu0 %v379
    %471 = vmatpush.msra.mxu0 %v377
    %472 = vmatpush.msra.mxu0 %v375
    %473 = vmatpush.msra.mxu0 %v373
    %474 = vmatpush.msra.mxu0 %v371
    %475 = vmatpush.msra.mxu0 %v369
    %476 = vmatpush.msra.mxu0 %v367
    %477 = vmatpush.msra.mxu0 %v365
    %478 = vmatpush.msra.mxu0 %v363
    %479 = vmatpush.msra.mxu0 %v361
    %480 = vmatpush.msra.mxu0 %v359
    %481 = vmatpush.msra.mxu0 %v357
    %482 = vmatmul.f32.gmra.mxu0 %v354
    %v483 = vpop.f32.mrf.mxu0
    %v484 = vadd.f32 %v423, %v483
    %485 = vdwg.mxu0
    %486 = vmatpush.msra.mxu0 %v419
    %487 = vmatpush.msra.mxu0 %v417
    %488 = vmatpush.msra.mxu0 %v415
    %489 = vmatpush.msra.mxu0 %v413
    %490 = vmatpush.msra.mxu0 %v411
    %491 = vmatpush.msra.mxu0 %v409
    %492 = vmatpush.msra.mxu0 %v407
    %493 = vmatpush.msra.mxu0 %v405
    %494 = vmatpush.msra.mxu0 %v403
    %495 = vmatpush.msra.mxu0 %v401
    %496 = vmatpush.msra.mxu0 %v399
    %497 = vmatpush.msra.mxu0 %v397
    %498 = vmatpush.msra.mxu0 %v395
    %499 = vmatpush.msra.mxu0 %v393
    %500 = vmatpush.msra.mxu0 %v391
    %501 = vmatpush.msra.mxu0 %v389
    %502 = vmatmul.f32.gmra.mxu0 %v355
    %v503 = vpop.f32.mrf.mxu0
    %v504 = vadd.f32 %v484, %v503
    %505 = vdwg.mxu0
    %v506 = vmax.f32 %v464, 0.0
    %v507 = vmax.f32 %v504, 0.0
    %v508 = vld [vmem:[#allocation11] sm:$0xff]
    %v509 = vld [vmem:[#allocation11 + $0x8] sm:$0xff]
    %v510 = vld [vmem:[#allocation11 + $0x10] sm:$0xff]
    %v511 = vld [vmem:[#allocation11 + $0x18] sm:$0xff]
    %v512 = vld [vmem:[#allocation11 + $0x20] sm:$0xff]
    %v513 = vld [vmem:[#allocation11 + $0x28] sm:$0xff]
    %v514 = vld [vmem:[#allocation11 + $0x30] sm:$0xff]
    %v515 = vld [vmem:[#allocation11 + $0x38] sm:$0xff]
    %v516 = vld [vmem:[#allocation11 + $0x40] sm:$0xff]
    %v517 = vld [vmem:[#allocation11 + $0x48] sm:$0xff]
    %v518 = vld [vmem:[#allocation11 + $0x50] sm:$0xff]
    %v519 = vld [vmem:[#allocation11 + $0x58] sm:$0xff]
    %v520 = vld [vmem:[#allocation11 + $0x60] sm:$0xff]
    %v521 = vld [vmem:[#allocation11 + $0x68] sm:$0xff]
    %v522 = vld [vmem:[#allocation11 + $0x70] sm:$0xff]
    %v523 = vld [vmem:[#allocation11 + $0x78] sm:$0xff]
    %v524 = vld [vmem:[#allocation11 + $0x80] sm:$0xff]
    %v525 = vld [vmem:[#allocation11 + $0x88] sm:$0xff]
    %v526 = vld [vmem:[#allocation11 + $0x90] sm:$0xff]
    %v527 = vld [vmem:[#allocation11 + $0x98] sm:$0xff]
    %v528 = vld [vmem:[#allocation11 + $0xa0] sm:$0xff]
    %v529 = vld [vmem:[#allocation11 + $0xa8] sm:$0xff]
    %v530 = vld [vmem:[#allocation11 + $0xb0] sm:$0xff]
    %v531 = vld [vmem:[#allocation11 + $0xb8] sm:$0xff]
    %v532 = vld [vmem:[#allocation11 + $0xc0] sm:$0xff]
    %v533 = vld [vmem:[#allocation11 + $0xc8] sm:$0xff]
    %v534 = vld [vmem:[#allocation11 + $0xd0] sm:$0xff]
    %v535 = vld [vmem:[#allocation11 + $0xd8] sm:$0xff]
    %v536 = vld [vmem:[#allocation11 + $0xe0] sm:$0xff]
    %v537 = vld [vmem:[#allocation11 + $0xe8] sm:$0xff]
    %v538 = vld [vmem:[#allocation11 + $0xf0] sm:$0xff]
    %v539 = vld [vmem:[#allocation11 + $0xf8] sm:$0xff]
    %v540 = vld [vmem:[%s8] sm:$0x1]
    %v542 = vperm.slane %v540, 0
    %544 = vmatpush.msra.mxu0 %v523
    %545 = vmatpush.msra.mxu0 %v522
    %546 = vmatpush.msra.mxu0 %v521
    %547 = vmatpush.msra.mxu0 %v520
    %548 = vmatpush.msra.mxu0 %v519
    %549 = vmatpush.msra.mxu0 %v518
    %550 = vmatpush.msra.mxu0 %v517
    %551 = vmatpush.msra.mxu0 %v516
    %552 = vmatpush.msra.mxu0 %v515
    %553 = vmatpush.msra.mxu0 %v514
    %554 = vmatpush.msra.mxu0 %v513
    %555 = vmatpush.msra.mxu0 %v512
    %556 = vmatpush.msra.mxu0 %v511
    %557 = vmatpush.msra.mxu0 %v510
    %558 = vmatpush.msra.mxu0 %v509
    %559 = vmatpush.msra.mxu0 %v508
    %560 = vmatmul.f32.gmra.mxu0 %v506
    %v561 = vpop.f32.mrf.mxu0
    %v562 = vadd.f32 %v542, %v561
    %563 = vdwg.mxu0
    %564 = vmatpush.msra.mxu0 %v539
    %565 = vmatpush.msra.mxu0 %v538
    %566 = vmatpush.msra.mxu0 %v537
    %567 = vmatpush.msra.mxu0 %v536
    %568 = vmatpush.msra.mxu0 %v535
    %569 = vmatpush.msra.mxu0 %v534
    %570 = vmatpush.msra.mxu0 %v533
    %571 = vmatpush.msra.mxu0 %v532
    %572 = vmatpush.msra.mxu0 %v531
    %573 = vmatpush.msra.mxu0 %v530
    %574 = vmatpush.msra.mxu0 %v529
    %575 = vmatpush.msra.mxu0 %v528
    %576 = vmatpush.msra.mxu0 %v527
    %577 = vmatpush.msra.mxu0 %v526
    %578 = vmatpush.msra.mxu0 %v525
    %579 = vmatpush.msra.mxu0 %v524
    %580 = vmatmul.f32.gmra.mxu0 %v507
    %v581 = vpop.f32.mrf.mxu0
    %v582 = vadd.f32 %v562, %v581
    %583 = vdwg.mxu0
    %584 = vst [vmem:[#allocation13] sm:$0xff] %v582
    // Predicated region
    $region62: #{tpu_custom_call.1} parent=1 // pred_check
      _
    $region63: #{tpu_custom_call.1} parent=1 // pred_check_branch
      %586 = sbr.rel (0) target = $region65
    $region64: #{tpu_custom_call.1} parent=1 // pred_region
      %588 = vsyncadd [#allocation4], 0
      %s590 = sshll.u32 [#allocation13], 4
      %s591 = int_to_ptr.vmem [resolvable:$true] %s590
      %s592 = sshll.u32 %s9, 4
      %s593 = int_to_ptr.hbm [resolvable:$true] %s592
      %595 = dma.vmem_to_hbm [thread:$0]  %s591, 128, %s593, [#allocation4]
    $region65: #{tpu_custom_call.1} parent=1 // pred_fallthru
      _
    // Predicated region
    $region66: #{tpu_custom_call.1} parent=1 // pred_check
      _
    $region67: #{tpu_custom_call.1} parent=1 // pred_check_branch
      %597 = sbr.rel (0) target = $region69
    $region68: #{tpu_custom_call.1} parent=1 // pred_region
      %599 = dma.done [#allocation4], 128
    $region69: #{tpu_custom_call.1} parent=1 // pred_fallthru
      _
    %600 = vsyncpa [#allocation3], 1
    %601 = vsyncpa [#allocation6], 1
    %602 = vsyncpa [#allocation9], 1
    %603 = vsyncpa [#allocation12], 1
    %604 = vsyncpa [#allocation4], 1

</llo_original>
